<compile_context>
chip_gen: v7x
topology: tpu7x:2x2x1
jax: 0.10.0
libtpu: 0.0.40
codegen_flags: <defaults>
</compile_context>

<pallas_src>
import functools

import jax
import jax.numpy as jnp
from jax.experimental import pallas as pl
from jax.experimental.pallas import tpu as pltpu


def lpamlp_kernel(fj_ref, f_ref,
                  wA1_ref, bA1_ref,
                  w2_ref, b2_ref,
                  wf1_ref, bf1_ref,
                  wf2_ref, bf2_ref,
                  o_ref):
    """One (batch, point-tile) block per grid step.

    fj_ref : (1, 1, Cin_pad, K*TN) bf16  [dp ; fj] neighbor features (lane = K*TN)
    f_ref  : (1, 1, C, TN)         f32   residual / identity features (lane = TN)
    o_ref  : (1, 1, C, TN)         f32
    """
    C, TN = o_ref.shape[2], o_ref.shape[3]
    K = fj_ref.shape[3] // TN

    x = fj_ref[0, 0]                                    # (Cin_pad, K*TN) bf16
    identity = f_ref[0, 0]                              # (C, TN) f32

    # attn_local + convs[0] in a single batched MXU pass (fused (2C, Cin) weight,
    # bf16 operands, f32 accumulation).
    h2 = jnp.dot(wA1_ref[...], x, preferred_element_type=jnp.float32) + bA1_ref[...]
    attn = h2[:C]                                       # (C, K*TN) f32
    h = jnp.maximum(h2[C:], 0.0).astype(jnp.bfloat16)   # ReLU, back to bf16 for MXU
    xi = jnp.dot(w2_ref[...], h, preferred_element_type=jnp.float32) + b2_ref[...]

    # Softmax over the K neighbor slots via lane-tile-aligned static slices
    # (TN is a multiple of 128, so each slice is a cheap aligned view; K is small).
    m = attn[:, 0:TN]
    for k in range(1, K):
        m = jnp.maximum(m, attn[:, k * TN:(k + 1) * TN])
    s = jnp.zeros_like(m)
    acc = jnp.zeros_like(m)
    for k in range(K):
        # TODO(synk): on v6e/v7x this exp can run in bf16 (~2x EUP throughput) once
        # the kernel stops being HBM-bound; kept f32 for exact reference parity.
        p = jnp.exp(attn[:, k * TN:(k + 1) * TN] - m)
        s = s + p
        acc = acc + p * xi[:, k * TN:(k + 1) * TN]
    # exact f32 divide keeps validation tight; pl.reciprocal(s, approx=True) is a
    # valid EUP micro-opt if the VALU ever becomes the binding slot.
    fcur = acc / s
    fcur = jnp.maximum(fcur + identity, 0.0)            # act(f + identity)

    # FFN (1x1 conv1d -> ReLU -> 1x1 conv1d) + residual + ReLU.
    g = jnp.maximum(
        jnp.dot(wf1_ref[...], fcur.astype(jnp.bfloat16),
                preferred_element_type=jnp.float32) + bf1_ref[...], 0.0)
    g = jnp.dot(wf2_ref[...], g.astype(jnp.bfloat16),
                preferred_element_type=jnp.float32) + bf2_ref[...]
    o_ref[0, 0] = jnp.maximum(g + fcur, 0.0).astype(o_ref.dtype)


def knn_group_dp_fj(p, f_cn, K):
    """Neighbor-grouping glue: returns fj_cat (B, N, K, 3 + C)."""
    # TODO(synk): ball-query radius masking is approximated with KNN; at production N
    # use a blocked KNN instead of the dense (B, N, N) distance matrix.
    d2 = jnp.sum((p[:, :, None, :] - p[:, None, :, :]) ** 2, axis=-1)   # (B, N, N)
    _, idx = jax.lax.top_k(-d2, K)                                      # (B, N, K)
    grouped_p = jax.vmap(lambda pb, ib: pb[ib])(p, idx)                 # (B, N, K, 3)
    dp = grouped_p - p[:, :, None, :]                                   # (B, N, K, 3)
    f_nlc = jnp.transpose(f_cn, (0, 2, 1))                              # (B, N, C)
    fj = jax.vmap(lambda fb, ib: fb[ib])(f_nlc, idx)                    # (B, N, K, C)
    return jnp.concatenate([dp, fj], axis=-1)                           # dp_fj concat


def _pick_tile_n(N, B, tile_n):
    """Largest lane-aligned tile dividing N, shrunk so B*NT keeps both TCs busy."""
    assert N % 128 == 0, "N must be a multiple of 128 (lane width)"
    tn = max(128, min(tile_n, N))
    tn -= tn % 128
    while tn > 128 and N % tn != 0:
        tn -= 128
    # v7x has 2 TensorCores: keep at least ~4 grid steps so neither core idles.
    while (B * (N // tn) < 4 and tn >= 256
           and (tn // 2) % 128 == 0 and N % (tn // 2) == 0):
        tn //= 2
    return tn


def _vmem_limit_bytes(C, Cin_pad, K, tn, weight_bytes, fj_buffers):
    """Generation-aware VMEM budget: sized from actual buffers, capped at ~75% of VMEM."""
    fj_bytes = fj_buffers * Cin_pad * K * tn * 2            # bf16 fj tiles (multi-buffered)
    io_bytes = 2 * 2 * C * tn * 4                           # f residual in + out, f32, 2x buffered
    live_bytes = 5 * C * K * tn * 4 + 8 * C * tn * 4        # h2/attn/h/xi + softmax temporaries
    need = int(1.5 * (fj_bytes + io_bytes + 2 * weight_bytes + live_bytes)) + (4 << 20)
    try:
        cap = int(getattr(pltpu.get_tpu_info(), "vmem_capacity_bytes", 64 << 20))
    except Exception:                                        # pragma: no cover
        cap = 64 << 20                                       # conservative v7x-sized fallback
    return max(16 << 20, min(need, int(0.75 * cap)))


def lpamlp_pallas(fj_cat, f_cn, params, *, tile_n=512, fj_buffers=2):
    """fj_cat: (B, N, K, Cin) f32, f_cn: (B, C, N) f32 -> (B, C, N) f32.

    tile_n: point-tile width (default 512; raise toward 1024 on v5e/v6e, keep <=~512
            on v7x's 64 MiB VMEM at production C).
    fj_buffers: pipeline depth for the fj input (set 3 on v5e if DMA is exposed).
    """
    B, N, K, Cin = fj_cat.shape
    C = f_cn.shape[1]
    assert C % 8 == 0, "channel count must be sublane-aligned"
    tn = _pick_tile_n(N, B, tile_n)
    NT = N // tn
    KT = K * tn
    # TODO(synk): bf16 native sublane tiling is 16 rows, so Cin_pad=24 half-fills a
    # tile; pad to 32 only if the Mosaic dump shows a relayout (costs +33% fj bytes).
    Cin_pad = ((Cin + 7) // 8) * 8

    # Lane-dense, N-tiled neighbor tensor: (B, NT, Cin_pad, K*TN), bf16.
    # Cast FIRST so the wrapper's pad/reshape/transpose round trip moves bf16, not f32.
    # TODO(synk): an in-kernel gather (idx via scalar prefetch + VMEM-resident f)
    # would remove this K*-replicated HBM tensor entirely (~Kx input-traffic cut).
    fj_b = fj_cat.astype(jnp.bfloat16)
    fj_b = jnp.pad(fj_b, ((0, 0), (0, 0), (0, 0), (0, Cin_pad - Cin)))
    fj_blk = fj_b.reshape(B, NT, tn, K, Cin_pad)
    fj_blk = jnp.transpose(fj_blk, (0, 1, 4, 3, 2)).reshape(B, NT, Cin_pad, KT)

    # Residual/output as (B, NT, C, TN): one contiguous lane-dense DMA per grid block
    # (the f tensor is small, so this transpose is cheap wrapper plumbing).
    f_blk = jnp.transpose(f_cn.reshape(B, C, NT, tn), (0, 2, 1, 3))

    # Weights: transpose to (out, in), fuse attn_local with convs[0], bf16 for the MXU.
    wa, ba, w1, b1, w2, b2, wf1, bf1, wf2, bf2 = params
    wA1 = jnp.concatenate([wa, w1], axis=1).T                               # (2C, Cin)
    wA1 = jnp.pad(wA1, ((0, 0), (0, Cin_pad - Cin))).astype(jnp.bfloat16)   # (2C, Cin_pad)
    bA1 = jnp.concatenate([ba, b1], axis=1).T                               # (2C, 1) f32
    weights = (wA1, bA1,
               w2.T.astype(jnp.bfloat16), b2.T,
               wf1.T.astype(jnp.bfloat16), bf1.T,
               wf2.T.astype(jnp.bfloat16), bf2.T)
    weight_bytes = sum(int(w.size) * w.dtype.itemsize for w in weights)

    fj_spec_kwargs = {}
    if fj_buffers != 2:        # deeper buffering (e.g. 3 on v5e) only when requested
        fj_spec_kwargs["pipeline_mode"] = pl.Buffered(fj_buffers)

    out_blk = pl.pallas_call(
        lpamlp_kernel,
        out_shape=jax.ShapeDtypeStruct((B, NT, C, tn), f_cn.dtype),
        grid_spec=pltpu.PrefetchScalarGridSpec(
            num_scalar_prefetch=0,
            grid=(B, NT),
            in_specs=[
                pl.BlockSpec((1, 1, Cin_pad, KT), lambda b, j: (b, j, 0, 0),
                             **fj_spec_kwargs),
                pl.BlockSpec((1, 1, C, tn), lambda b, j: (b, j, 0, 0)),
            ] + [pl.BlockSpec(w.shape, lambda b, j: (0, 0)) for w in weights],
            out_specs=pl.BlockSpec((1, 1, C, tn), lambda b, j: (b, j, 0, 0)),
        ),
        compiler_params=pltpu.CompilerParams(
            dimension_semantics=("parallel", "parallel"),
            vmem_limit_bytes=_vmem_limit_bytes(C, Cin_pad, K, tn,
                                               weight_bytes, fj_buffers),
        ),
    )(fj_blk, f_blk, *weights)
    return jnp.transpose(out_blk, (0, 2, 1, 3)).reshape(B, C, N)


def lpamlp_reference(fj_cat, f_cn, params, matmul_dtype=jnp.float32):
    """Pure-JAX reference. matmul_dtype=bfloat16 mirrors the kernel's MXU precision."""
    wa, ba, w1, b1, w2, b2, wf1, bf1, wf2, bf2 = params
    f_nlc = jnp.transpose(f_cn, (0, 2, 1))                            # (B, N, C)
    cast = lambda a: a.astype(matmul_dtype)
    ein = functools.partial(jnp.einsum, preferred_element_type=jnp.float32)
    attn = ein('bnkc,cd->bnkd', cast(fj_cat), cast(wa)) + ba
    h = jax.nn.relu(ein('bnkc,cd->bnkd', cast(fj_cat), cast(w1)) + b1)
    xi = ein('bnkc,cd->bnkd', cast(h), cast(w2)) + b2
    cattn = jax.nn.softmax(attn, axis=2)                              # softmax over K (tau=1)
    fo = jnp.sum(cattn * xi, axis=2)                                  # (B, N, C)
    fo = jax.nn.relu(fo + f_nlc)
    g = jax.nn.relu(ein('bnc,cd->bnd', cast(fo), cast(wf1)) + bf1)
    g = ein('bnc,cd->bnd', cast(g), cast(wf2)) + bf2
    out = jax.nn.relu(g + fo)
    return jnp.transpose(out, (0, 2, 1))                              # (B, C, N)


def init_params(key, C, Cin):
    ks = jax.random.split(key, 10)
    sc_in = 1.0 / jnp.sqrt(Cin)
    sc_c = 1.0 / jnp.sqrt(C)
    wa = jax.random.normal(ks[0], (Cin, C), jnp.float32) * sc_in
    ba = jax.random.normal(ks[1], (1, C), jnp.float32) * 0.01
    w1 = jax.random.normal(ks[2], (Cin, C), jnp.float32) * sc_in
    b1 = jax.random.normal(ks[3], (1, C), jnp.float32) * 0.01
    w2 = jax.random.normal(ks[4], (C, C), jnp.float32) * sc_c
    b2 = jax.random.normal(ks[5], (1, C), jnp.float32) * 0.01
    wf1 = jax.random.normal(ks[6], (C, C), jnp.float32) * sc_c
    bf1 = jax.random.normal(ks[7], (1, C), jnp.float32) * 0.01
    wf2 = jax.random.normal(ks[8], (C, C), jnp.float32) * sc_c
    bf2 = jax.random.normal(ks[9], (1, C), jnp.float32) * 0.01
    return (wa, ba, w1, b1, w2, b2, wf1, bf1, wf2, bf2)


if __name__ == "__main__":
    B, N, C, K = 2, 512, 16, 8
    Cin = 3 + C                          # CHANNEL_MAP['dp_fj']

    key = jax.random.PRNGKey(0)
    kp, kf, kw = jax.random.split(key, 3)
    p = jax.random.normal(kp, (B, N, 3), jnp.float32)
    f = jax.random.normal(kf, (B, C, N), jnp.float32)
    params = init_params(kw, C, Cin)

    fj_cat = knn_group_dp_fj(p, f, K)                       # (B, N, K, Cin)
    f_out = lpamlp_pallas(fj_cat, f, params)                # (B, C, N), tile auto-picked
    f_out = jax.block_until_ready(f_out)
    assert f_out.shape == (B, C, N)

    # Tight check against a reference using the same bf16 MXU-operand rounding.
    ref_bf16 = lpamlp_reference(fj_cat, f, params, matmul_dtype=jnp.bfloat16)
    assert jnp.allclose(f_out, ref_bf16, atol=1e-2, rtol=1e-2), \
        float(jnp.max(jnp.abs(f_out - ref_bf16)))

    # Loose sanity check against the pure-f32 reference (covers bf16 rounding drift).
    ref_f32 = lpamlp_reference(fj_cat, f, params, matmul_dtype=jnp.float32)
    assert jnp.allclose(f_out, ref_f32, atol=2e-1, rtol=2e-1), \
        float(jnp.max(jnp.abs(f_out - ref_f32)))

    print("KERNEL_OK")
</pallas_src>

<mosaic_0001>
module attributes {stable_mosaic.version = 11 : i64} {
  func.func @lpamlp_kernel(%arg0: i32, %arg1: i32, %arg2: memref<1x1x24x2048xbf16, #tpu.memory_space<vmem>>, %arg3: memref<1x1x16x256xf32, #tpu.memory_space<vmem>>, %arg4: memref<32x24xbf16, #tpu.memory_space<vmem>>, %arg5: memref<32x1xf32, #tpu.memory_space<vmem>>, %arg6: memref<16x16xbf16, #tpu.memory_space<vmem>>, %arg7: memref<16x1xf32, #tpu.memory_space<vmem>>, %arg8: memref<16x16xbf16, #tpu.memory_space<vmem>>, %arg9: memref<16x1xf32, #tpu.memory_space<vmem>>, %arg10: memref<16x16xbf16, #tpu.memory_space<vmem>>, %arg11: memref<16x1xf32, #tpu.memory_space<vmem>>, %arg12: memref<1x1x16x256xf32, #tpu.memory_space<vmem>>) attributes {dimension_semantics = [#tpu.dimension_semantics<parallel>, #tpu.dimension_semantics<parallel>], iteration_bounds = array<i64: 2, 2>, scalar_prefetch = 0 : i64, scratch_operands = 0 : i64, tpu.core_type = #tpu.core_type<tc>, window_params = [{transform_indices = @transform_0, window_bounds = array<i64: 1, 1, 24, 2048>}, {transform_indices = @transform_1, window_bounds = array<i64: 1, 1, 16, 256>}, {pipeline_mode = #tpu.pipeline_mode<synchronous>, transform_indices = @transform_2, window_bounds = array<i64: 32, 24>}, {pipeline_mode = #tpu.pipeline_mode<synchronous>, transform_indices = @transform_3, window_bounds = array<i64: 32, 1>}, {pipeline_mode = #tpu.pipeline_mode<synchronous>, transform_indices = @transform_4, window_bounds = array<i64: 16, 16>}, {pipeline_mode = #tpu.pipeline_mode<synchronous>, transform_indices = @transform_5, window_bounds = array<i64: 16, 1>}, {pipeline_mode = #tpu.pipeline_mode<synchronous>, transform_indices = @transform_6, window_bounds = array<i64: 16, 16>}, {pipeline_mode = #tpu.pipeline_mode<synchronous>, transform_indices = @transform_7, window_bounds = array<i64: 16, 1>}, {pipeline_mode = #tpu.pipeline_mode<synchronous>, transform_indices = @transform_8, window_bounds = array<i64: 16, 16>}, {pipeline_mode = #tpu.pipeline_mode<synchronous>, transform_indices = @transform_9, window_bounds = array<i64: 16, 1>}, {transform_indices = @transform_10, window_bounds = array<i64: 1, 1, 16, 256>}]} {
    %c0 = arith.constant 0 : index
    %c0_0 = arith.constant 0 : index
    %c0_1 = arith.constant 0 : index
    %c0_2 = arith.constant 0 : index
    %0 = vector.load %arg2[%c0, %c0_0, %c0_1, %c0_2] : memref<1x1x24x2048xbf16, #tpu.memory_space<vmem>>, vector<1x1x24x2048xbf16>
    %1 = vector.shape_cast %0 : vector<1x1x24x2048xbf16> to vector<24x2048xbf16>
    %c0_3 = arith.constant 0 : index
    %c0_4 = arith.constant 0 : index
    %c0_5 = arith.constant 0 : index
    %c0_6 = arith.constant 0 : index
    %2 = vector.load %arg3[%c0_3, %c0_4, %c0_5, %c0_6] : memref<1x1x16x256xf32, #tpu.memory_space<vmem>>, vector<1x1x16x256xf32>
    %3 = vector.shape_cast %2 : vector<1x1x16x256xf32> to vector<16x256xf32>
    %c0_7 = arith.constant 0 : index
    %c0_8 = arith.constant 0 : index
    %4 = vector.load %arg4[%c0_7, %c0_8] : memref<32x24xbf16, #tpu.memory_space<vmem>>, vector<32x24xbf16>
    %cst = arith.constant dense<0.000000e+00> : vector<32x2048xf32>
    %5 = tpu.matmul %4, %1, %cst {dimension_numbers = #tpu.dot_dimension_numbers<[1], [0], [0], [1], [0, 0, 1, 1], [], []>} : vector<32x24xbf16>, vector<24x2048xbf16>, vector<32x2048xf32> -> vector<32x2048xf32>
    %c0_9 = arith.constant 0 : index
    %c0_10 = arith.constant 0 : index
    %6 = vector.load %arg5[%c0_9, %c0_10] : memref<32x1xf32, #tpu.memory_space<vmem>>, vector<32x1xf32>
    %7 = vector.broadcast %6 : vector<32x1xf32> to vector<32x2048xf32>
    %8 = arith.addf %5, %7 : vector<32x2048xf32>
    %9 = vector.extract_strided_slice %8 {offsets = [0, 0], sizes = [16, 2048], strides = [1, 1]} : vector<32x2048xf32> to vector<16x2048xf32>
    %10 = vector.extract_strided_slice %8 {offsets = [16, 0], sizes = [16, 2048], strides = [1, 1]} : vector<32x2048xf32> to vector<16x2048xf32>
    %cst_11 = arith.constant 0.000000e+00 : f32
    %11 = vector.broadcast %cst_11 : f32 to vector<16x2048xf32>
    %12 = arith.maximumf %10, %11 : vector<16x2048xf32>
    %13 = arith.truncf %12 : vector<16x2048xf32> to vector<16x2048xbf16>
    %c0_12 = arith.constant 0 : index
    %c0_13 = arith.constant 0 : index
    %14 = vector.load %arg6[%c0_12, %c0_13] : memref<16x16xbf16, #tpu.memory_space<vmem>>, vector<16x16xbf16>
    %cst_14 = arith.constant dense<0.000000e+00> : vector<16x2048xf32>
    %15 = tpu.matmul %14, %13, %cst_14 {dimension_numbers = #tpu.dot_dimension_numbers<[1], [0], [0], [1], [0, 0, 1, 1], [], []>} : vector<16x16xbf16>, vector<16x2048xbf16>, vector<16x2048xf32> -> vector<16x2048xf32>
    %c0_15 = arith.constant 0 : index
    %c0_16 = arith.constant 0 : index
    %16 = vector.load %arg7[%c0_15, %c0_16] : memref<16x1xf32, #tpu.memory_space<vmem>>, vector<16x1xf32>
    %17 = vector.broadcast %16 : vector<16x1xf32> to vector<16x2048xf32>
    %18 = arith.addf %15, %17 : vector<16x2048xf32>
    %19 = vector.extract_strided_slice %9 {offsets = [0, 0], sizes = [16, 256], strides = [1, 1]} : vector<16x2048xf32> to vector<16x256xf32>
    %20 = vector.extract_strided_slice %9 {offsets = [0, 256], sizes = [16, 256], strides = [1, 1]} : vector<16x2048xf32> to vector<16x256xf32>
    %21 = arith.maximumf %19, %20 : vector<16x256xf32>
    %22 = vector.extract_strided_slice %9 {offsets = [0, 512], sizes = [16, 256], strides = [1, 1]} : vector<16x2048xf32> to vector<16x256xf32>
    %23 = arith.maximumf %21, %22 : vector<16x256xf32>
    %24 = vector.extract_strided_slice %9 {offsets = [0, 768], sizes = [16, 256], strides = [1, 1]} : vector<16x2048xf32> to vector<16x256xf32>
    %25 = arith.maximumf %23, %24 : vector<16x256xf32>
    %26 = vector.extract_strided_slice %9 {offsets = [0, 1024], sizes = [16, 256], strides = [1, 1]} : vector<16x2048xf32> to vector<16x256xf32>
    %27 = arith.maximumf %25, %26 : vector<16x256xf32>
    %28 = vector.extract_strided_slice %9 {offsets = [0, 1280], sizes = [16, 256], strides = [1, 1]} : vector<16x2048xf32> to vector<16x256xf32>
    %29 = arith.maximumf %27, %28 : vector<16x256xf32>
    %30 = vector.extract_strided_slice %9 {offsets = [0, 1536], sizes = [16, 256], strides = [1, 1]} : vector<16x2048xf32> to vector<16x256xf32>
    %31 = arith.maximumf %29, %30 : vector<16x256xf32>
    %32 = vector.extract_strided_slice %9 {offsets = [0, 1792], sizes = [16, 256], strides = [1, 1]} : vector<16x2048xf32> to vector<16x256xf32>
    %33 = arith.maximumf %31, %32 : vector<16x256xf32>
    %cst_17 = arith.constant 0.000000e+00 : f32
    %34 = vector.broadcast %cst_17 : f32 to vector<16x256xf32>
    %cst_18 = arith.constant 0.000000e+00 : f32
    %35 = vector.broadcast %cst_18 : f32 to vector<16x256xf32>
    %36 = vector.extract_strided_slice %9 {offsets = [0, 0], sizes = [16, 256], strides = [1, 1]} : vector<16x2048xf32> to vector<16x256xf32>
    %37 = arith.subf %36, %33 : vector<16x256xf32>
    %38 = math.exp %37 : vector<16x256xf32>
    %39 = arith.addf %34, %38 : vector<16x256xf32>
    %40 = vector.extract_strided_slice %18 {offsets = [0, 0], sizes = [16, 256], strides = [1, 1]} : vector<16x2048xf32> to vector<16x256xf32>
    %41 = arith.mulf %38, %40 : vector<16x256xf32>
    %42 = arith.addf %35, %41 : vector<16x256xf32>
    %43 = vector.extract_strided_slice %9 {offsets = [0, 256], sizes = [16, 256], strides = [1, 1]} : vector<16x2048xf32> to vector<16x256xf32>
    %44 = arith.subf %43, %33 : vector<16x256xf32>
    %45 = math.exp %44 : vector<16x256xf32>
    %46 = arith.addf %39, %45 : vector<16x256xf32>
    %47 = vector.extract_strided_slice %18 {offsets = [0, 256], sizes = [16, 256], strides = [1, 1]} : vector<16x2048xf32> to vector<16x256xf32>
    %48 = arith.mulf %45, %47 : vector<16x256xf32>
    %49 = arith.addf %42, %48 : vector<16x256xf32>
    %50 = vector.extract_strided_slice %9 {offsets = [0, 512], sizes = [16, 256], strides = [1, 1]} : vector<16x2048xf32> to vector<16x256xf32>
    %51 = arith.subf %50, %33 : vector<16x256xf32>
    %52 = math.exp %51 : vector<16x256xf32>
    %53 = arith.addf %46, %52 : vector<16x256xf32>
    %54 = vector.extract_strided_slice %18 {offsets = [0, 512], sizes = [16, 256], strides = [1, 1]} : vector<16x2048xf32> to vector<16x256xf32>
    %55 = arith.mulf %52, %54 : vector<16x256xf32>
    %56 = arith.addf %49, %55 : vector<16x256xf32>
    %57 = vector.extract_strided_slice %9 {offsets = [0, 768], sizes = [16, 256], strides = [1, 1]} : vector<16x2048xf32> to vector<16x256xf32>
    %58 = arith.subf %57, %33 : vector<16x256xf32>
    %59 = math.exp %58 : vector<16x256xf32>
    %60 = arith.addf %53, %59 : vector<16x256xf32>
    %61 = vector.extract_strided_slice %18 {offsets = [0, 768], sizes = [16, 256], strides = [1, 1]} : vector<16x2048xf32> to vector<16x256xf32>
    %62 = arith.mulf %59, %61 : vector<16x256xf32>
    %63 = arith.addf %56, %62 : vector<16x256xf32>
    %64 = vector.extract_strided_slice %9 {offsets = [0, 1024], sizes = [16, 256], strides = [1, 1]} : vector<16x2048xf32> to vector<16x256xf32>
    %65 = arith.subf %64, %33 : vector<16x256xf32>
    %66 = math.exp %65 : vector<16x256xf32>
    %67 = arith.addf %60, %66 : vector<16x256xf32>
    %68 = vector.extract_strided_slice %18 {offsets = [0, 1024], sizes = [16, 256], strides = [1, 1]} : vector<16x2048xf32> to vector<16x256xf32>
    %69 = arith.mulf %66, %68 : vector<16x256xf32>
    %70 = arith.addf %63, %69 : vector<16x256xf32>
    %71 = vector.extract_strided_slice %9 {offsets = [0, 1280], sizes = [16, 256], strides = [1, 1]} : vector<16x2048xf32> to vector<16x256xf32>
    %72 = arith.subf %71, %33 : vector<16x256xf32>
    %73 = math.exp %72 : vector<16x256xf32>
    %74 = arith.addf %67, %73 : vector<16x256xf32>
    %75 = vector.extract_strided_slice %18 {offsets = [0, 1280], sizes = [16, 256], strides = [1, 1]} : vector<16x2048xf32> to vector<16x256xf32>
    %76 = arith.mulf %73, %75 : vector<16x256xf32>
    %77 = arith.addf %70, %76 : vector<16x256xf32>
    %78 = vector.extract_strided_slice %9 {offsets = [0, 1536], sizes = [16, 256], strides = [1, 1]} : vector<16x2048xf32> to vector<16x256xf32>
    %79 = arith.subf %78, %33 : vector<16x256xf32>
    %80 = math.exp %79 : vector<16x256xf32>
    %81 = arith.addf %74, %80 : vector<16x256xf32>
    %82 = vector.extract_strided_slice %18 {offsets = [0, 1536], sizes = [16, 256], strides = [1, 1]} : vector<16x2048xf32> to vector<16x256xf32>
    %83 = arith.mulf %80, %82 : vector<16x256xf32>
    %84 = arith.addf %77, %83 : vector<16x256xf32>
    %85 = vector.extract_strided_slice %9 {offsets = [0, 1792], sizes = [16, 256], strides = [1, 1]} : vector<16x2048xf32> to vector<16x256xf32>
    %86 = arith.subf %85, %33 : vector<16x256xf32>
    %87 = math.exp %86 : vector<16x256xf32>
    %88 = arith.addf %81, %87 : vector<16x256xf32>
    %89 = vector.extract_strided_slice %18 {offsets = [0, 1792], sizes = [16, 256], strides = [1, 1]} : vector<16x2048xf32> to vector<16x256xf32>
    %90 = arith.mulf %87, %89 : vector<16x256xf32>
    %91 = arith.addf %84, %90 : vector<16x256xf32>
    %92 = arith.divf %91, %88 : vector<16x256xf32>
    %93 = arith.addf %92, %3 : vector<16x256xf32>
    %cst_19 = arith.constant 0.000000e+00 : f32
    %94 = vector.broadcast %cst_19 : f32 to vector<16x256xf32>
    %95 = arith.maximumf %93, %94 : vector<16x256xf32>
    %c0_20 = arith.constant 0 : index
    %c0_21 = arith.constant 0 : index
    %96 = vector.load %arg8[%c0_20, %c0_21] : memref<16x16xbf16, #tpu.memory_space<vmem>>, vector<16x16xbf16>
    %97 = arith.truncf %95 : vector<16x256xf32> to vector<16x256xbf16>
    %cst_22 = arith.constant dense<0.000000e+00> : vector<16x256xf32>
    %98 = tpu.matmul %96, %97, %cst_22 {dimension_numbers = #tpu.dot_dimension_numbers<[1], [0], [0], [1], [0, 0, 1, 1], [], []>} : vector<16x16xbf16>, vector<16x256xbf16>, vector<16x256xf32> -> vector<16x256xf32>
    %c0_23 = arith.constant 0 : index
    %c0_24 = arith.constant 0 : index
    %99 = vector.load %arg9[%c0_23, %c0_24] : memref<16x1xf32, #tpu.memory_space<vmem>>, vector<16x1xf32>
    %100 = vector.broadcast %99 : vector<16x1xf32> to vector<16x256xf32>
    %101 = arith.addf %98, %100 : vector<16x256xf32>
    %cst_25 = arith.constant 0.000000e+00 : f32
    %102 = vector.broadcast %cst_25 : f32 to vector<16x256xf32>
    %103 = arith.maximumf %101, %102 : vector<16x256xf32>
    %c0_26 = arith.constant 0 : index
    %c0_27 = arith.constant 0 : index
    %104 = vector.load %arg10[%c0_26, %c0_27] : memref<16x16xbf16, #tpu.memory_space<vmem>>, vector<16x16xbf16>
    %105 = arith.truncf %103 : vector<16x256xf32> to vector<16x256xbf16>
    %cst_28 = arith.constant dense<0.000000e+00> : vector<16x256xf32>
    %106 = tpu.matmul %104, %105, %cst_28 {dimension_numbers = #tpu.dot_dimension_numbers<[1], [0], [0], [1], [0, 0, 1, 1], [], []>} : vector<16x16xbf16>, vector<16x256xbf16>, vector<16x256xf32> -> vector<16x256xf32>
    %c0_29 = arith.constant 0 : index
    %c0_30 = arith.constant 0 : index
    %107 = vector.load %arg11[%c0_29, %c0_30] : memref<16x1xf32, #tpu.memory_space<vmem>>, vector<16x1xf32>
    %108 = vector.broadcast %107 : vector<16x1xf32> to vector<16x256xf32>
    %109 = arith.addf %106, %108 : vector<16x256xf32>
    %110 = arith.addf %109, %95 : vector<16x256xf32>
    %cst_31 = arith.constant 0.000000e+00 : f32
    %111 = vector.broadcast %cst_31 : f32 to vector<16x256xf32>
    %112 = arith.maximumf %110, %111 : vector<16x256xf32>
    %c0_32 = arith.constant 0 : index
    %c0_33 = arith.constant 0 : index
    %c0_34 = arith.constant 0 : index
    %c0_35 = arith.constant 0 : index
    %113 = vector.load %arg12[%c0_32, %c0_33, %c0_34, %c0_35] : memref<1x1x16x256xf32, #tpu.memory_space<vmem>>, vector<1x1x16x256xf32>
    %114 = vector.shape_cast %113 : vector<1x1x16x256xf32> to vector<16x256xf32>
    %115 = vector.shape_cast %112 : vector<16x256xf32> to vector<1x1x16x256xf32>
    tpu.vector_store %arg12[%c0_32, %c0_33, %c0_34, %c0_35], %115 {strides = array<i32>} : memref<1x1x16x256xf32, #tpu.memory_space<vmem>>, vector<1x1x16x256xf32>,
    return
  }
  func.func @transform_0(%arg0: i32, %arg1: i32) -> (i32, i32, i32, i32) {
    %c0_i32 = arith.constant 0 : i32
    %c0_i32_0 = arith.constant 0 : i32
    %c0_i32_1 = arith.constant 0 : i32
    return %arg0, %arg1, %c0_i32, %c0_i32_0 : i32, i32, i32, i32
  }
  func.func @transform_1(%arg0: i32, %arg1: i32) -> (i32, i32, i32, i32) {
    %c0_i32 = arith.constant 0 : i32
    %c0_i32_0 = arith.constant 0 : i32
    %c0_i32_1 = arith.constant 0 : i32
    return %arg0, %arg1, %c0_i32, %c0_i32_0 : i32, i32, i32, i32
  }
  func.func @transform_2(%arg0: i32, %arg1: i32) -> (i32, i32) {
    %c0_i32 = arith.constant 0 : i32
    %c0_i32_0 = arith.constant 0 : i32
    %c0_i32_1 = arith.constant 0 : i32
    return %c0_i32, %c0_i32_0 : i32, i32
  }
  func.func @transform_3(%arg0: i32, %arg1: i32) -> (i32, i32) {
    %c0_i32 = arith.constant 0 : i32
    %c0_i32_0 = arith.constant 0 : i32
    %c0_i32_1 = arith.constant 0 : i32
    return %c0_i32, %c0_i32_0 : i32, i32
  }
  func.func @transform_4(%arg0: i32, %arg1: i32) -> (i32, i32) {
    %c0_i32 = arith.constant 0 : i32
    %c0_i32_0 = arith.constant 0 : i32
    %c0_i32_1 = arith.constant 0 : i32
    return %c0_i32, %c0_i32_0 : i32, i32
  }
  func.func @transform_5(%arg0: i32, %arg1: i32) -> (i32, i32) {
    %c0_i32 = arith.constant 0 : i32
    %c0_i32_0 = arith.constant 0 : i32
    %c0_i32_1 = arith.constant 0 : i32
    return %c0_i32, %c0_i32_0 : i32, i32
  }
  func.func @transform_6(%arg0: i32, %arg1: i32) -> (i32, i32) {
    %c0_i32 = arith.constant 0 : i32
    %c0_i32_0 = arith.constant 0 : i32
    %c0_i32_1 = arith.constant 0 : i32
    return %c0_i32, %c0_i32_0 : i32, i32
  }
  func.func @transform_7(%arg0: i32, %arg1: i32) -> (i32, i32) {
    %c0_i32 = arith.constant 0 : i32
    %c0_i32_0 = arith.constant 0 : i32
    %c0_i32_1 = arith.constant 0 : i32
    return %c0_i32, %c0_i32_0 : i32, i32
  }
  func.func @transform_8(%arg0: i32, %arg1: i32) -> (i32, i32) {
    %c0_i32 = arith.constant 0 : i32
    %c0_i32_0 = arith.constant 0 : i32
    %c0_i32_1 = arith.constant 0 : i32
    return %c0_i32, %c0_i32_0 : i32, i32
  }
  func.func @transform_9(%arg0: i32, %arg1: i32) -> (i32, i32) {
    %c0_i32 = arith.constant 0 : i32
    %c0_i32_0 = arith.constant 0 : i32
    %c0_i32_1 = arith.constant 0 : i32
    return %c0_i32, %c0_i32_0 : i32, i32
  }
  func.func @transform_10(%arg0: i32, %arg1: i32) -> (i32, i32, i32, i32) {
    %c0_i32 = arith.constant 0 : i32
    %c0_i32_0 = arith.constant 0 : i32
    %c0_i32_1 = arith.constant 0 : i32
    return %arg0, %arg1, %c0_i32, %c0_i32_0 : i32, i32, i32, i32
  }
}

</mosaic_0001>

<llo_original>
// kernel: tpu_custom_call.1
$region0: #{tpu_custom_call.1}
  #allocation0 [shape = 'u32[]', space=smem, size = 0x4, offset = 0x4, fixed_abs, tag = 'smem constant byte address 0x4 - core index']
  #allocation1 [shape = 'u32[144,128]{1,0:T(1,128)}', space=vmem, size = 0x12000, scoped, tag = 'internal scratch']
  %s0 = inlined_call_operand.hbm [shape: bf16[2,2,24,2048], index: 0, kind: input, shape index: {}]
  %s1 = inlined_call_operand.hbm [shape: f32[2,2,16,256], index: 1, kind: input, shape index: {}]
  %s2 = inlined_call_operand.vmem [shape: bf16[32,24], index: 2, kind: input, shape index: {}]
  %s3 = inlined_call_operand.vmem [shape: f32[32,1], index: 3, kind: input, shape index: {}]
  %s4 = inlined_call_operand.vmem [shape: bf16[16,16], index: 4, kind: input, shape index: {}]
  %s5 = inlined_call_operand.vmem [shape: f32[16,1], index: 5, kind: input, shape index: {}]
  %s6 = inlined_call_operand.vmem [shape: bf16[16,16], index: 6, kind: input, shape index: {}]
  %s7 = inlined_call_operand.vmem [shape: f32[16,1], index: 7, kind: input, shape index: {}]
  %s8 = inlined_call_operand.vmem [shape: bf16[16,16], index: 8, kind: input, shape index: {}]
  %s9 = inlined_call_operand.vmem [shape: f32[16,1], index: 9, kind: input, shape index: {}]
  %s10 = inlined_call_operand.hbm [shape: f32[2,2,16,256], index: 10, kind: output, shape index: {}]
  %s11 = sld [smem:[#allocation0]]
  $region81: #{tpu_custom_call.1} parent=0
    _
  %s13 = ssub.s32 1, %s11
  %s14 = scalar_select 0, %s13, %s11
  $region1: #{tpu_custom_call.1} parent=0
    #allocation2 [shape = 'u8[196608]{0}', space=vmem, size = 0x30000, scoped, tag = 'input window, operand 0']
    #allocation3 [shape = 's32[2]{0}', space=sflag, size = 0x8, scoped, tag = 'scoped memory for tpu_custom_call.1']
    #allocation4 [shape = 's32[2]{0}', space=sflag, size = 0x8, scoped, tag = 'scoped memory for tpu_custom_call.1']
    #allocation5 [shape = 'u8[32768]{0}', space=vmem, size = 0x8000, scoped, tag = 'input window, operand 1']
    #allocation6 [shape = 's32[2]{0}', space=sflag, size = 0x8, scoped, tag = 'scoped memory for tpu_custom_call.1']
    #allocation7 [shape = 'u8[32768]{0}', space=vmem, size = 0x8000, scoped, tag = 'output window, operand 0']
    %15 = vsyncpa [#allocation3], 0
    %s16 = scalar_lea.sflag [#allocation3], 1
    %17 = vsyncpa %s16, 0
    %18 = vsyncpa [#allocation6], 0
    %s19 = scalar_lea.sflag [#allocation6], 1
    %20 = vsyncpa %s19, 0
    %21 = vsyncpa [#allocation4], 0
    %s22 = scalar_lea.sflag [#allocation4], 1
    %23 = vsyncpa %s22, 0
    loop: start=0, step=1, limit=6
    $region2: #{tpu_custom_call.1} parent=1 // loop_pre_header
      _
    $region3: #{tpu_custom_call.1} parent=1 // loop_header
      %s25 = sphi 0, %s29
      %p26 = scmp.ge.s32.totalorder %s25, 6
      %s32 = sphi 0, %s44
      %s33 = sphi 0, %s40
      %s34 = sphi 0, %s32
      %s35 = sphi 0, %s33
      %s36 = sphi 0, %s34
      %s37 = sphi 0, %s35
      %s49 = sphi 0, %s51
      %s52 = sphi 0, %s49
      %s53 = sphi 0, %s52
      %s69 = sphi 0, %s53
      %s77 = sphi 0, %s79
      %s80 = sphi 0, %s77
      %s81 = sphi 0, %s80
      %s97 = sphi 0, %s81
      %s101 = sphi 0, %s101
      %s103 = sphi 0, %s101
      %s104 = sphi 0, %s103
      %s118 = sphi 0, %s104
      %s122 = sphi 0, %s122
      %s124 = sphi 0, %s122
      %s125 = sphi 0, %s124
      %s139 = sphi 0, %s125
      %s143 = sphi 0, %s143
      %s145 = sphi 0, %s143
      %s146 = sphi 0, %s145
      %s160 = sphi 0, %s146
      %s164 = sphi 0, %s164
      %s166 = sphi 0, %s164
      %s167 = sphi 0, %s166
      %s181 = sphi 0, %s167
      %s185 = sphi 0, %s185
      %s187 = sphi 0, %s185
      %s188 = sphi 0, %s187
      %s202 = sphi 0, %s188
      %s206 = sphi 0, %s206
      %s208 = sphi 0, %s206
      %s209 = sphi 0, %s208
      %s223 = sphi 0, %s209
      %s227 = sphi 0, %s227
      %s229 = sphi 0, %s227
      %s230 = sphi 0, %s229
      %s244 = sphi 0, %s230
      %s248 = sphi 0, %s248
      %s250 = sphi 0, %s248
      %s251 = sphi 0, %s250
      %s265 = sphi 0, %s251
      %s273 = sphi 0, %s275
      %s276 = sphi 0, %s273
      %s277 = sphi 0, %s276
      %s293 = sphi 0, %s277
    $region4: #{tpu_custom_call.1} parent=1 // loop_header_branch
      %28 = sbr.rel (%p26) target = $region8
    $region5: #{tpu_custom_call.1} parent=1 // loop_body
      %s30 = ssub.s32 %s25, 1
      %s31 = ssub.s32 %s25, 2
      %s38 = sadd.s32 1, %s33
      %p39 = scmp.ge.s32.totalorder %s38, 2
      %s40 = scalar_select %p39, 0, %s38
      %s41 = sadd.s32 1, %s32
      %s42 = scalar_select %p39, %s41, %s32
      %p43 = scmp.ge.s32.totalorder %s42, 2
      %s44 = scalar_select %p43, 0, %s42
      %s45 = ssub.s32 %s32, %s44
      %s46 = ssub.s32 %s33, %s40
      %s47 = sor.u32 %s45, %s46
      %p48 = scmp.eq.s32.totalorder %s47, 0
      %s50 = sadd.s32 %s49, 1
      %s51 = scalar_select %p48, %s49, %s50
      %p54 = pneg %p48
      %p55 = scmp.eq.s32.totalorder %s25, 3
      %p56 = por %p54, %p55
      %p57 = scmp.ne.s32.totalorder %s49, %s52
      %p58 = scmp.eq.s32.totalorder %s25, 0
      %p59 = por %p57, %p58
      %p60 = scmp.ne.s32.totalorder %s49, %s52
      %p61 = scmp.eq.s32.totalorder %s30, 3
      %p62 = por %p60, %p61
      %p63 = scmp.ne.s32.totalorder %s52, %s53
      %p64 = scmp.eq.s32.totalorder %s30, 0
      %p65 = por %p63, %p64
      %p66 = scmp.ne.s32.totalorder %s52, %s53
      %p67 = scmp.eq.s32.totalorder %s31, 3
      %p68 = por %p66, %p67
      %p70 = scmp.ne.s32.totalorder %s53, %s69
      %p71 = scmp.eq.s32.totalorder %s31, 0
      %p72 = por %p70, %p71
      %s73 = ssub.s32 %s32, %s44
      %s74 = ssub.s32 %s33, %s40
      %s75 = sor.u32 %s73, %s74
      %p76 = scmp.eq.s32.totalorder %s75, 0
      %s78 = sadd.s32 %s77, 1
      %s79 = scalar_select %p76, %s77, %s78
      %p82 = pneg %p76
      %p83 = scmp.eq.s32.totalorder %s25, 3
      %p84 = por %p82, %p83
      %p85 = scmp.ne.s32.totalorder %s77, %s80
      %p86 = scmp.eq.s32.totalorder %s25, 0
      %p87 = por %p85, %p86
      %p88 = scmp.ne.s32.totalorder %s77, %s80
      %p89 = scmp.eq.s32.totalorder %s30, 3
      %p90 = por %p88, %p89
      %p91 = scmp.ne.s32.totalorder %s80, %s81
      %p92 = scmp.eq.s32.totalorder %s30, 0
      %p93 = por %p91, %p92
      %p94 = scmp.ne.s32.totalorder %s80, %s81
      %p95 = scmp.eq.s32.totalorder %s31, 3
      %p96 = por %p94, %p95
      %p98 = scmp.ne.s32.totalorder %s81, %s97
      %p99 = scmp.eq.s32.totalorder %s31, 0
      %p100 = por %p98, %p99
      %s102 = sadd.s32 %s101, 1
      %p105 = scmp.eq.s32.totalorder %s25, 3
      %p106 = scmp.ne.s32.totalorder %s101, %s103
      %p107 = scmp.eq.s32.totalorder %s25, 0
      %p108 = por %p106, %p107
      %p109 = scmp.ne.s32.totalorder %s101, %s103
      %p110 = scmp.eq.s32.totalorder %s30, 3
      %p111 = por %p109, %p110
      %p112 = scmp.ne.s32.totalorder %s103, %s104
      %p113 = scmp.eq.s32.totalorder %s30, 0
      %p114 = por %p112, %p113
      %p115 = scmp.ne.s32.totalorder %s103, %s104
      %p116 = scmp.eq.s32.totalorder %s31, 3
      %p117 = por %p115, %p116
      %p119 = scmp.ne.s32.totalorder %s104, %s118
      %p120 = scmp.eq.s32.totalorder %s31, 0
      %p121 = por %p119, %p120
      %s123 = sadd.s32 %s122, 1
      %p126 = scmp.eq.s32.totalorder %s25, 3
      %p127 = scmp.ne.s32.totalorder %s122, %s124
      %p128 = scmp.eq.s32.totalorder %s25, 0
      %p129 = por %p127, %p128
      %p130 = scmp.ne.s32.totalorder %s122, %s124
      %p131 = scmp.eq.s32.totalorder %s30, 3
      %p132 = por %p130, %p131
      %p133 = scmp.ne.s32.totalorder %s124, %s125
      %p134 = scmp.eq.s32.totalorder %s30, 0
      %p135 = por %p133, %p134
      %p136 = scmp.ne.s32.totalorder %s124, %s125
      %p137 = scmp.eq.s32.totalorder %s31, 3
      %p138 = por %p136, %p137
      %p140 = scmp.ne.s32.totalorder %s125, %s139
      %p141 = scmp.eq.s32.totalorder %s31, 0
      %p142 = por %p140, %p141
      %s144 = sadd.s32 %s143, 1
      %p147 = scmp.eq.s32.totalorder %s25, 3
      %p148 = scmp.ne.s32.totalorder %s143, %s145
      %p149 = scmp.eq.s32.totalorder %s25, 0
      %p150 = por %p148, %p149
      %p151 = scmp.ne.s32.totalorder %s143, %s145
      %p152 = scmp.eq.s32.totalorder %s30, 3
      %p153 = por %p151, %p152
      %p154 = scmp.ne.s32.totalorder %s145, %s146
      %p155 = scmp.eq.s32.totalorder %s30, 0
      %p156 = por %p154, %p155
      %p157 = scmp.ne.s32.totalorder %s145, %s146
      %p158 = scmp.eq.s32.totalorder %s31, 3
      %p159 = por %p157, %p158
      %p161 = scmp.ne.s32.totalorder %s146, %s160
      %p162 = scmp.eq.s32.totalorder %s31, 0
      %p163 = por %p161, %p162
      %s165 = sadd.s32 %s164, 1
      %p168 = scmp.eq.s32.totalorder %s25, 3
      %p169 = scmp.ne.s32.totalorder %s164, %s166
      %p170 = scmp.eq.s32.totalorder %s25, 0
      %p171 = por %p169, %p170
      %p172 = scmp.ne.s32.totalorder %s164, %s166
      %p173 = scmp.eq.s32.totalorder %s30, 3
      %p174 = por %p172, %p173
      %p175 = scmp.ne.s32.totalorder %s166, %s167
      %p176 = scmp.eq.s32.totalorder %s30, 0
      %p177 = por %p175, %p176
      %p178 = scmp.ne.s32.totalorder %s166, %s167
      %p179 = scmp.eq.s32.totalorder %s31, 3
      %p180 = por %p178, %p179
      %p182 = scmp.ne.s32.totalorder %s167, %s181
      %p183 = scmp.eq.s32.totalorder %s31, 0
      %p184 = por %p182, %p183
      %s186 = sadd.s32 %s185, 1
      %p189 = scmp.eq.s32.totalorder %s25, 3
      %p190 = scmp.ne.s32.totalorder %s185, %s187
      %p191 = scmp.eq.s32.totalorder %s25, 0
      %p192 = por %p190, %p191
      %p193 = scmp.ne.s32.totalorder %s185, %s187
      %p194 = scmp.eq.s32.totalorder %s30, 3
      %p195 = por %p193, %p194
      %p196 = scmp.ne.s32.totalorder %s187, %s188
      %p197 = scmp.eq.s32.totalorder %s30, 0
      %p198 = por %p196, %p197
      %p199 = scmp.ne.s32.totalorder %s187, %s188
      %p200 = scmp.eq.s32.totalorder %s31, 3
      %p201 = por %p199, %p200
      %p203 = scmp.ne.s32.totalorder %s188, %s202
      %p204 = scmp.eq.s32.totalorder %s31, 0
      %p205 = por %p203, %p204
      %s207 = sadd.s32 %s206, 1
      %p210 = scmp.eq.s32.totalorder %s25, 3
      %p211 = scmp.ne.s32.totalorder %s206, %s208
      %p212 = scmp.eq.s32.totalorder %s25, 0
      %p213 = por %p211, %p212
      %p214 = scmp.ne.s32.totalorder %s206, %s208
      %p215 = scmp.eq.s32.totalorder %s30, 3
      %p216 = por %p214, %p215
      %p217 = scmp.ne.s32.totalorder %s208, %s209
      %p218 = scmp.eq.s32.totalorder %s30, 0
      %p219 = por %p217, %p218
      %p220 = scmp.ne.s32.totalorder %s208, %s209
      %p221 = scmp.eq.s32.totalorder %s31, 3
      %p222 = por %p220, %p221
      %p224 = scmp.ne.s32.totalorder %s209, %s223
      %p225 = scmp.eq.s32.totalorder %s31, 0
      %p226 = por %p224, %p225
      %s228 = sadd.s32 %s227, 1
      %p231 = scmp.eq.s32.totalorder %s25, 3
      %p232 = scmp.ne.s32.totalorder %s227, %s229
      %p233 = scmp.eq.s32.totalorder %s25, 0
      %p234 = por %p232, %p233
      %p235 = scmp.ne.s32.totalorder %s227, %s229
      %p236 = scmp.eq.s32.totalorder %s30, 3
      %p237 = por %p235, %p236
      %p238 = scmp.ne.s32.totalorder %s229, %s230
      %p239 = scmp.eq.s32.totalorder %s30, 0
      %p240 = por %p238, %p239
      %p241 = scmp.ne.s32.totalorder %s229, %s230
      %p242 = scmp.eq.s32.totalorder %s31, 3
      %p243 = por %p241, %p242
      %p245 = scmp.ne.s32.totalorder %s230, %s244
      %p246 = scmp.eq.s32.totalorder %s31, 0
      %p247 = por %p245, %p246
      %s249 = sadd.s32 %s248, 1
      %p252 = scmp.eq.s32.totalorder %s25, 3
      %p253 = scmp.ne.s32.totalorder %s248, %s250
      %p254 = scmp.eq.s32.totalorder %s25, 0
      %p255 = por %p253, %p254
      %p256 = scmp.ne.s32.totalorder %s248, %s250
      %p257 = scmp.eq.s32.totalorder %s30, 3
      %p258 = por %p256, %p257
      %p259 = scmp.ne.s32.totalorder %s250, %s251
      %p260 = scmp.eq.s32.totalorder %s30, 0
      %p261 = por %p259, %p260
      %p262 = scmp.ne.s32.totalorder %s250, %s251
      %p263 = scmp.eq.s32.totalorder %s31, 3
      %p264 = por %p262, %p263
      %p266 = scmp.ne.s32.totalorder %s251, %s265
      %p267 = scmp.eq.s32.totalorder %s31, 0
      %p268 = por %p266, %p267
      %s269 = ssub.s32 %s32, %s44
      %s270 = ssub.s32 %s33, %s40
      %s271 = sor.u32 %s269, %s270
      %p272 = scmp.eq.s32.totalorder %s271, 0
      %s274 = sadd.s32 %s273, 1
      %s275 = scalar_select %p272, %s273, %s274
      %p278 = pneg %p272
      %p279 = scmp.eq.s32.totalorder %s25, 3
      %p280 = por %p278, %p279
      %p281 = scmp.ne.s32.totalorder %s273, %s276
      %p282 = scmp.eq.s32.totalorder %s25, 0
      %p283 = por %p281, %p282
      %p284 = scmp.ne.s32.totalorder %s273, %s276
      %p285 = scmp.eq.s32.totalorder %s30, 3
      %p286 = por %p284, %p285
      %p287 = scmp.ne.s32.totalorder %s276, %s277
      %p288 = scmp.eq.s32.totalorder %s30, 0
      %p289 = por %p287, %p288
      %p290 = scmp.ne.s32.totalorder %s276, %s277
      %p291 = scmp.eq.s32.totalorder %s31, 3
      %p292 = por %p290, %p291
      %p294 = scmp.ne.s32.totalorder %s277, %s293
      %p295 = scmp.eq.s32.totalorder %s31, 0
      %p296 = por %p294, %p295
      %p297 = scmp.le.s32.totalorder 1, %s25
      %p298 = scmp.lt.s32.totalorder %s25, 5
      %p299 = pnand %p297, %p298
      %p300 = pneg %p299
      // Predicated region
      $region9: #{tpu_custom_call.1} parent=5 // pred_check
        _
      $region10: #{tpu_custom_call.1} parent=5 // pred_check_branch
        %302 = sbr.rel (%p299) target = $region12
      $region11: #{tpu_custom_call.1} parent=5 // pred_region
        %s303 = ssub.s32 %s25, 1
        // Predicated region
        $region13: #{tpu_custom_call.1} parent=11 // pred_check
          %p304 = pneg %p114
        $region14: #{tpu_custom_call.1} parent=11 // pred_check_branch
          %306 = sbr.rel (%p304) target = $region16
        $region15: #{tpu_custom_call.1} parent=11 // pred_region
          _
        $region16: #{tpu_custom_call.1} parent=11 // pred_fallthru
          _
        // Predicated region
        $region17: #{tpu_custom_call.1} parent=11 // pred_check
          %p307 = pneg %p135
        $region18: #{tpu_custom_call.1} parent=11 // pred_check_branch
          %309 = sbr.rel (%p307) target = $region20
        $region19: #{tpu_custom_call.1} parent=11 // pred_region
          _
        $region20: #{tpu_custom_call.1} parent=11 // pred_fallthru
          _
        // Predicated region
        $region21: #{tpu_custom_call.1} parent=11 // pred_check
          %p310 = pneg %p156
        $region22: #{tpu_custom_call.1} parent=11 // pred_check_branch
          %312 = sbr.rel (%p310) target = $region24
        $region23: #{tpu_custom_call.1} parent=11 // pred_region
          _
        $region24: #{tpu_custom_call.1} parent=11 // pred_fallthru
          _
        // Predicated region
        $region25: #{tpu_custom_call.1} parent=11 // pred_check
          %p313 = pneg %p177
        $region26: #{tpu_custom_call.1} parent=11 // pred_check_branch
          %315 = sbr.rel (%p313) target = $region28
        $region27: #{tpu_custom_call.1} parent=11 // pred_region
          _
        $region28: #{tpu_custom_call.1} parent=11 // pred_fallthru
          _
        // Predicated region
        $region29: #{tpu_custom_call.1} parent=11 // pred_check
          %p316 = pneg %p198
        $region30: #{tpu_custom_call.1} parent=11 // pred_check_branch
          %318 = sbr.rel (%p316) target = $region32
        $region31: #{tpu_custom_call.1} parent=11 // pred_region
          _
        $region32: #{tpu_custom_call.1} parent=11 // pred_fallthru
          _
        // Predicated region
        $region33: #{tpu_custom_call.1} parent=11 // pred_check
          %p319 = pneg %p219
        $region34: #{tpu_custom_call.1} parent=11 // pred_check_branch
          %321 = sbr.rel (%p319) target = $region36
        $region35: #{tpu_custom_call.1} parent=11 // pred_region
          _
        $region36: #{tpu_custom_call.1} parent=11 // pred_fallthru
          _
        // Predicated region
        $region37: #{tpu_custom_call.1} parent=11 // pred_check
          %p322 = pneg %p240
        $region38: #{tpu_custom_call.1} parent=11 // pred_check_branch
          %324 = sbr.rel (%p322) target = $region40
        $region39: #{tpu_custom_call.1} parent=11 // pred_region
          _
        $region40: #{tpu_custom_call.1} parent=11 // pred_fallthru
          _
        // Predicated region
        $region41: #{tpu_custom_call.1} parent=11 // pred_check
          %p325 = pneg %p261
        $region42: #{tpu_custom_call.1} parent=11 // pred_check_branch
          %327 = sbr.rel (%p325) target = $region44
        $region43: #{tpu_custom_call.1} parent=11 // pred_region
          _
        $region44: #{tpu_custom_call.1} parent=11 // pred_fallthru
          _
      $region12: #{tpu_custom_call.1} parent=5 // pred_fallthru
        _
      %p328 = scmp.lt.s32.totalorder %s25, 4
      // Predicated region
      $region45: #{tpu_custom_call.1} parent=5 // pred_check
        %p329 = pneg %p328
      $region46: #{tpu_custom_call.1} parent=5 // pred_check_branch
        %331 = sbr.rel (%p329) target = $region48
      $region47: #{tpu_custom_call.1} parent=5 // pred_region
        // Predicated region
        $region49: #{tpu_custom_call.1} parent=47 // pred_check
          %p332 = pneg %p59
        $region50: #{tpu_custom_call.1} parent=47 // pred_check_branch
          %334 = sbr.rel (%p332) target = $region52
        $region51: #{tpu_custom_call.1} parent=47 // pred_region
          %s335 = sand.u32 %s49, 1
          %s336 = scalar_lea.sflag [#allocation3], %s335
          %s337 = sand.u32 %s49, 1
          %s338 = smul.addr %s337, 192
          %s339 = scalar_lea.vmem [#allocation2], %s338
          %s341 = ssub.s32 3072, 3072
          %342 = vsyncadd %s336, %s341
          %s343 = smul.addr %s33, 48
          %s344 = smul.addr %s32, 96
          %s345 = sadd.s32 %s343, %s344
          %s346 = smul.addr %s345, 64
          %s347 = scalar_lea.hbm %s0, %s346
          %s348 = sshll.u32 %s339, 4
          %s349 = int_to_ptr.vmem [resolvable:$true] %s348
          %354 = dma.hbm_to_vmem [thread:$0]  %s347, 3072, %s349, %s336, 1024, 1024, 64
        $region52: #{tpu_custom_call.1} parent=47 // pred_fallthru
          _
        // Predicated region
        $region53: #{tpu_custom_call.1} parent=47 // pred_check
          %p355 = pneg %p87
        $region54: #{tpu_custom_call.1} parent=47 // pred_check_branch
          %357 = sbr.rel (%p355) target = $region56
        $region55: #{tpu_custom_call.1} parent=47 // pred_region
          %s358 = sand.u32 %s77, 1
          %s359 = scalar_lea.sflag [#allocation6], %s358
          %s360 = sand.u32 %s77, 1
          %s361 = smul.addr %s360, 32
          %s362 = scalar_lea.vmem [#allocation5], %s361
          %s364 = ssub.s32 512, 512
          %365 = vsyncadd %s359, %s364
          %s366 = smul.addr %s33, 4
          %s367 = smul.addr %s32, 8
          %s368 = sadd.s32 %s366, %s367
          %s369 = smul.addr %s368, 128
          %s370 = scalar_lea.hbm %s1, %s369
          %s371 = sshll.u32 %s362, 4
          %s372 = int_to_ptr.vmem [resolvable:$true] %s371
          %377 = dma.hbm_to_vmem [thread:$0]  %s370, 512, %s372, %s359, 256, 256, 16
        $region56: #{tpu_custom_call.1} parent=47 // pred_fallthru
          _
      $region48: #{tpu_custom_call.1} parent=5 // pred_fallthru
        _
      %p378 = scmp.le.s32.totalorder 1, %s25
      %p379 = scmp.lt.s32.totalorder %s25, 5
      %p380 = pnand %p378, %p379
      %p381 = pneg %p380
      // Predicated region
      $region57: #{tpu_custom_call.1} parent=5 // pred_check
        _
      $region58: #{tpu_custom_call.1} parent=5 // pred_check_branch
        %383 = sbr.rel (%p380) target = $region60
      $region59: #{tpu_custom_call.1} parent=5 // pred_region
        %s384 = ssub.s32 %s25, 1
        %s385 = sand.u32 %s52, 1
        %s386 = scalar_lea.sflag [#allocation3], %s385
        %s387 = sand.u32 %s52, 1
        %s388 = smul.addr %s387, 192
        %s389 = scalar_lea.vmem [#allocation2], %s388
        // Predicated region
        $region61: #{tpu_custom_call.1} parent=59 // pred_check
          %p390 = pneg %p65
        $region62: #{tpu_custom_call.1} parent=59 // pred_check_branch
          %392 = sbr.rel (%p390) target = $region64
        $region63: #{tpu_custom_call.1} parent=59 // pred_region
          %393 = dma.done %s386, 3072
        $region64: #{tpu_custom_call.1} parent=59 // pred_fallthru
          _
        %s394 = sand.u32 %s80, 1
        %s395 = scalar_lea.sflag [#allocation6], %s394
        %s396 = sand.u32 %s80, 1
        %s397 = smul.addr %s396, 32
        %s398 = scalar_lea.vmem [#allocation5], %s397
        // Predicated region
        $region65: #{tpu_custom_call.1} parent=59 // pred_check
          %p399 = pneg %p93
        $region66: #{tpu_custom_call.1} parent=59 // pred_check_branch
          %401 = sbr.rel (%p399) target = $region68
        $region67: #{tpu_custom_call.1} parent=59 // pred_region
          %402 = dma.done %s395, 512
        $region68: #{tpu_custom_call.1} parent=59 // pred_fallthru
          _
        %s403 = sand.u32 %s52, 1
        %s404 = scalar_lea.sflag [#allocation3], %s403
        %s405 = sand.u32 %s52, 1
        %s406 = smul.addr %s405, 192
        %s407 = scalar_lea.vmem [#allocation2], %s406
        %p408 = pneg %p65
        %p409 = pneg %p62
        %s410 = sand.u32 %s80, 1
        %s411 = scalar_lea.sflag [#allocation6], %s410
        %s412 = sand.u32 %s80, 1
        %s413 = smul.addr %s412, 32
        %s414 = scalar_lea.vmem [#allocation5], %s413
        %p415 = pneg %p93
        %p416 = pneg %p90
        %p417 = pneg %p114
        %p418 = pneg %p111
        %p419 = pneg %p135
        %p420 = pneg %p132
        %p421 = pneg %p156
        %p422 = pneg %p153
        %p423 = pneg %p177
        %p424 = pneg %p174
        %p425 = pneg %p198
        %p426 = pneg %p195
        %p427 = pneg %p219
        %p428 = pneg %p216
        %p429 = pneg %p240
        %p430 = pneg %p237
        %p431 = pneg %p261
        %p432 = pneg %p258
        %p433 = pneg %p289
        %p434 = pneg %p286
        %s435 = sand.u32 %s276, 1
        %s436 = scalar_lea.sflag [#allocation4], %s435
        %s437 = sand.u32 %s276, 1
        %s438 = smul.addr %s437, 32
        %s439 = scalar_lea.vmem [#allocation7], %s438
        %v441 = vld [vmem:[%s389] sm:$0xff]
        %v442 = vld [vmem:[%s389 + $0x8] sm:$0xff]
        %v443 = vld [vmem:[%s389 + $0x10] sm:$0xff]
        %v444 = vld [vmem:[%s389 + $0x18] sm:$0xff]
        %v445 = vld [vmem:[%s389 + $0x20] sm:$0xff]
        %v446 = vld [vmem:[%s389 + $0x28] sm:$0xff]
        %v447 = vld [vmem:[%s389 + $0x30] sm:$0xff]
        %v448 = vld [vmem:[%s389 + $0x38] sm:$0xff]
        %v449 = vld [vmem:[%s389 + $0x40] sm:$0xff]
        %v450 = vld [vmem:[%s389 + $0x48] sm:$0xff]
        %v451 = vld [vmem:[%s389 + $0x50] sm:$0xff]
        %v452 = vld [vmem:[%s389 + $0x58] sm:$0xff]
        %v453 = vld [vmem:[%s389 + $0x60] sm:$0xff]
        %v454 = vld [vmem:[%s389 + $0x68] sm:$0xff]
        %v455 = vld [vmem:[%s389 + $0x70] sm:$0xff]
        %v456 = vld [vmem:[%s389 + $0x78] sm:$0xff]
        %v457 = vld [vmem:[%s389 + $0x80] sm:$0xff]
        %v458 = vld [vmem:[%s389 + $0x88] sm:$0xff]
        %v459 = vld [vmem:[%s389 + $0x90] sm:$0xff]
        %v460 = vld [vmem:[%s389 + $0x98] sm:$0xff]
        %v461 = vld [vmem:[%s389 + $0xa0] sm:$0xff]
        %v462 = vld [vmem:[%s389 + $0xa8] sm:$0xff]
        %v463 = vld [vmem:[%s389 + $0xb0] sm:$0xff]
        %v464 = vld [vmem:[%s389 + $0xb8] sm:$0xff]
        %v465 = vld [vmem:[%s398] sm:$0xff]
        %v466 = vld [vmem:[%s398 + $0x8] sm:$0xff]
        %v467 = vld [vmem:[%s398 + $0x10] sm:$0xff]
        %v468 = vld [vmem:[%s398 + $0x18] sm:$0xff]
        %v469 = vld [vmem:[%s2] sm:$0xf]
        %v470 = vld [vmem:[%s2 + $0x4] sm:$0xf]
        %v471 = vld [vmem:[%s2 + $0x8] sm:$0xf]
        %v472 = vld [vmem:[%s2 + $0xc] sm:$0xf]
        %v473 = vld [vmem:[%s3] sm:$0xff]
        %v474 = vld [vmem:[%s3 + $0x8] sm:$0xff]
        %v475 = vld [vmem:[%s3 + $0x10] sm:$0xff]
        %v476 = vld [vmem:[%s3 + $0x18] sm:$0xff]
        %478 = vset.pattern.permute.xlu0 0
        %479 = vperm.xlu0 %478, %v473
        %v480 = vpop.permute.xlu0 %479
        %483 = vset.pattern.permute.xlu0 0
        %484 = vperm.xlu0 %483, %v474
        %v485 = vpop.permute.xlu0 %484
        %488 = vset.pattern.permute.xlu0 0
        %489 = vperm.xlu0 %488, %v475
        %v490 = vpop.permute.xlu0 %489
        %493 = vset.pattern.permute.xlu0 0
        %494 = vperm.xlu0 %493, %v476
        %v495 = vpop.permute.xlu0 %494
        %v501 = vunpack.c.l.b16 %v469
        %v502 = vunpack.c.l.b16 %v470
        %v503 = vunpack.c.l.b16 %v471
        %v504 = vunpack.c.l.b16 %v472
        %v505 = vpack.c.b16 %v502, %v501
        %v506 = vpack.c.b16 %v504, %v503
        %v531 = vunpack.c.l.b16 %v441
        %v532 = vunpack.c.h.b16 %v441
        %v533 = vunpack.c.l.b16 %v442
        %v534 = vunpack.c.h.b16 %v442
        %v535 = vunpack.c.l.b16 %v443
        %v536 = vunpack.c.h.b16 %v443
        %v537 = vunpack.c.l.b16 %v444
        %v538 = vunpack.c.h.b16 %v444
        %v539 = vunpack.c.l.b16 %v445
        %v540 = vunpack.c.h.b16 %v445
        %v541 = vunpack.c.l.b16 %v446
        %v542 = vunpack.c.h.b16 %v446
        %v543 = vunpack.c.l.b16 %v447
        %v544 = vunpack.c.h.b16 %v447
        %v545 = vunpack.c.l.b16 %v448
        %v546 = vunpack.c.h.b16 %v448
        %v547 = vunpack.c.l.b16 %v449
        %v548 = vunpack.c.h.b16 %v449
        %v549 = vunpack.c.l.b16 %v450
        %v550 = vunpack.c.h.b16 %v450
        %v551 = vunpack.c.l.b16 %v451
        %v552 = vunpack.c.h.b16 %v451
        %v553 = vunpack.c.l.b16 %v452
        %v554 = vunpack.c.h.b16 %v452
        %v555 = vunpack.c.l.b16 %v453
        %v556 = vunpack.c.h.b16 %v453
        %v557 = vunpack.c.l.b16 %v454
        %v558 = vunpack.c.h.b16 %v454
        %v559 = vunpack.c.l.b16 %v455
        %v560 = vunpack.c.h.b16 %v455
        %v561 = vunpack.c.l.b16 %v456
        %v562 = vunpack.c.h.b16 %v456
        %v563 = vunpack.c.l.b16 %v457
        %v564 = vunpack.c.h.b16 %v457
        %v565 = vunpack.c.l.b16 %v458
        %v566 = vunpack.c.h.b16 %v458
        %v567 = vunpack.c.l.b16 %v459
        %v568 = vunpack.c.h.b16 %v459
        %v569 = vunpack.c.l.b16 %v460
        %v570 = vunpack.c.h.b16 %v460
        %v571 = vunpack.c.l.b16 %v461
        %v572 = vunpack.c.h.b16 %v461
        %v573 = vunpack.c.l.b16 %v462
        %v574 = vunpack.c.h.b16 %v462
        %v575 = vunpack.c.l.b16 %v463
        %v576 = vunpack.c.h.b16 %v463
        %v577 = vunpack.c.l.b16 %v464
        %v578 = vunpack.c.h.b16 %v464
        %v579 = vpack.c.b16 %v547, %v531
        %v580 = vpack.c.b16 %v548, %v532
        %v581 = vpack.c.b16 %v549, %v533
        %v582 = vpack.c.b16 %v550, %v534
        %v583 = vpack.c.b16 %v551, %v535
        %v584 = vpack.c.b16 %v552, %v536
        %v585 = vpack.c.b16 %v553, %v537
        %v586 = vpack.c.b16 %v554, %v538
        %v587 = vpack.c.b16 %v555, %v539
        %v588 = vpack.c.b16 %v556, %v540
        %v589 = vpack.c.b16 %v557, %v541
        %v590 = vpack.c.b16 %v558, %v542
        %v591 = vpack.c.b16 %v559, %v543
        %v592 = vpack.c.b16 %v560, %v544
        %v593 = vpack.c.b16 %v561, %v545
        %v594 = vpack.c.b16 %v562, %v546
        %v595 = vpack.c.b16 %v563, %v563
        %v596 = vpack.c.b16 %v564, %v564
        %v597 = vpack.c.b16 %v565, %v565
        %v598 = vpack.c.b16 %v566, %v566
        %v599 = vpack.c.b16 %v567, %v567
        %v600 = vpack.c.b16 %v568, %v568
        %v601 = vpack.c.b16 %v569, %v569
        %v602 = vpack.c.b16 %v570, %v570
        %v603 = vpack.c.b16 %v571, %v571
        %v604 = vpack.c.b16 %v572, %v572
        %v605 = vpack.c.b16 %v573, %v573
        %v606 = vpack.c.b16 %v574, %v574
        %v607 = vpack.c.b16 %v575, %v575
        %v608 = vpack.c.b16 %v576, %v576
        %v609 = vpack.c.b16 %v577, %v577
        %v610 = vpack.c.b16 %v578, %v578
        %vm627 = vcmask 195584
        %v629 = vsel %vm627, %v505, 0
        %v632 = vsel %vm627, %v506, 0
        %vm634 = vcmask 1043456
        %v636 = vsel %vm634, %v595, 0
        %v639 = vsel %vm634, %v596, 0
        %v642 = vsel %vm634, %v597, 0
        %v645 = vsel %vm634, %v598, 0
        %v648 = vsel %vm634, %v599, 0
        %v651 = vsel %vm634, %v600, 0
        %v654 = vsel %vm634, %v601, 0
        %v657 = vsel %vm634, %v602, 0
        %v660 = vsel %vm634, %v603, 0
        %v663 = vsel %vm634, %v604, 0
        %v666 = vsel %vm634, %v605, 0
        %v669 = vsel %vm634, %v606, 0
        %v672 = vsel %vm634, %v607, 0
        %v675 = vsel %vm634, %v608, 0
        %v678 = vsel %vm634, %v609, 0
        %v681 = vsel %vm634, %v610, 0
        %683 = vmatprep.subr.bf16.mxu0 %v580
        %684 = vmatpush1.bf16.msra.mxu0 %v579
        %685 = vmatprep.subr.bf16.mxu0 %v639
        %686 = vmatpush1.bf16.msra.mxu0 %v636
        %687 = vmatprep.subr.bf16.mxu0 0
        %688 = vmatpush1.bf16.msra.mxu0 0
        %689 = vmatprep.subr.bf16.mxu0 0
        %690 = vmatpush1.bf16.msra.mxu0 0
        %691 = vmatprep.subr.bf16.mxu0 0
        %692 = vmatpush1.bf16.msra.mxu0 0
        %693 = vmatprep.subr.bf16.mxu0 0
        %694 = vmatpush1.bf16.msra.mxu0 0
        %695 = vmatprep.subr.bf16.mxu0 0
        %696 = vmatpush1.bf16.msra.mxu0 0
        %697 = vmatprep.subr.bf16.mxu0 0
        %698 = vmatpush1.bf16.msra.mxu0 0
        %699 = vmatprep.subr.bf16.mxu0 0
        %700 = vmatpush1.bf16.msra.mxu0 0
        %701 = vmatprep.subr.bf16.mxu0 0
        %702 = vmatpush1.bf16.msra.mxu0 0
        %703 = vmatprep.subr.bf16.mxu0 0
        %704 = vmatpush1.bf16.msra.mxu0 0
        %705 = vmatprep.subr.bf16.mxu0 0
        %706 = vmatpush1.bf16.msra.mxu0 0
        %707 = vmatprep.subr.bf16.mxu0 0
        %708 = vmatpush1.bf16.msra.mxu0 0
        %709 = vmatprep.subr.bf16.mxu0 0
        %710 = vmatpush1.bf16.msra.mxu0 0
        %711 = vmatprep.subr.bf16.mxu0 0
        %712 = vmatpush1.bf16.msra.mxu0 0
        %713 = vmatprep.subr.bf16.mxu0 0
        %714 = vmatpush1.bf16.msra.mxu0 0
        %715 = vmatprep.mubr.bf16.mxu0 0
        %716 = vmatmul.mubr.bf16.gmra.mrb[0].mxu0 %v629
        %v717 = vpop.f32.mrb[0].mxu0
        %v718 = vadd.f32 %v480, %v717
        %v719 = vpop.f32.mrb[0].mxu0
        %v720 = vadd.f32 %v480, %v719
        %v721 = vpop.f32.mrb[0].mxu0
        %v722 = vadd.f32 %v485, %v721
        %v723 = vpop.f32.mrb[0].mxu0
        %v724 = vadd.f32 %v485, %v723
        %725 = vmatprep.mubr.bf16.mxu0 0
        %726 = vmatmul.mubr.bf16.gmra.mrb[0].mxu0 %v632
        %v727 = vpop.f32.mrb[0].mxu0
        %v728 = vadd.f32 %v490, %v727
        %v729 = vpop.f32.mrb[0].mxu0
        %v730 = vadd.f32 %v490, %v729
        %v731 = vpop.f32.mrb[0].mxu0
        %v732 = vadd.f32 %v495, %v731
        %v733 = vpop.f32.mrb[0].mxu0
        %v734 = vadd.f32 %v495, %v733
        %735 = vdwg.mxu0
        %736 = vmatprep.subr.bf16.mxu0 %v582
        %737 = vmatpush1.bf16.msra.mxu0 %v581
        %738 = vmatprep.subr.bf16.mxu0 %v645
        %739 = vmatpush1.bf16.msra.mxu0 %v642
        %740 = vmatprep.subr.bf16.mxu0 0
        %741 = vmatpush1.bf16.msra.mxu0 0
        %742 = vmatprep.subr.bf16.mxu0 0
        %743 = vmatpush1.bf16.msra.mxu0 0
        %744 = vmatprep.subr.bf16.mxu0 0
        %745 = vmatpush1.bf16.msra.mxu0 0
        %746 = vmatprep.subr.bf16.mxu0 0
        %747 = vmatpush1.bf16.msra.mxu0 0
        %748 = vmatprep.subr.bf16.mxu0 0
        %749 = vmatpush1.bf16.msra.mxu0 0
        %750 = vmatprep.subr.bf16.mxu0 0
        %751 = vmatpush1.bf16.msra.mxu0 0
        %752 = vmatprep.subr.bf16.mxu0 0
        %753 = vmatpush1.bf16.msra.mxu0 0
        %754 = vmatprep.subr.bf16.mxu0 0
        %755 = vmatpush1.bf16.msra.mxu0 0
        %756 = vmatprep.subr.bf16.mxu0 0
        %757 = vmatpush1.bf16.msra.mxu0 0
        %758 = vmatprep.subr.bf16.mxu0 0
        %759 = vmatpush1.bf16.msra.mxu0 0
        %760 = vmatprep.subr.bf16.mxu0 0
        %761 = vmatpush1.bf16.msra.mxu0 0
        %762 = vmatprep.subr.bf16.mxu0 0
        %763 = vmatpush1.bf16.msra.mxu0 0
        %764 = vmatprep.subr.bf16.mxu0 0
        %765 = vmatpush1.bf16.msra.mxu0 0
        %766 = vmatprep.subr.bf16.mxu0 0
        %767 = vmatpush1.bf16.msra.mxu0 0
        %768 = vmatprep.mubr.bf16.mxu0 0
        %769 = vmatmul.mubr.bf16.gmra.mrb[0].mxu0 %v629
        %v770 = vpop.f32.mrb[0].mxu0
        %v771 = vadd.f32 %v480, %v770
        %v772 = vpop.f32.mrb[0].mxu0
        %v773 = vadd.f32 %v480, %v772
        %v774 = vpop.f32.mrb[0].mxu0
        %v775 = vadd.f32 %v485, %v774
        %v776 = vpop.f32.mrb[0].mxu0
        %v777 = vadd.f32 %v485, %v776
        %778 = vmatprep.mubr.bf16.mxu0 0
        %779 = vmatmul.mubr.bf16.gmra.mrb[0].mxu0 %v632
        %v780 = vpop.f32.mrb[0].mxu0
        %v781 = vadd.f32 %v490, %v780
        %v782 = vpop.f32.mrb[0].mxu0
        %v783 = vadd.f32 %v490, %v782
        %v784 = vpop.f32.mrb[0].mxu0
        %v785 = vadd.f32 %v495, %v784
        %v786 = vpop.f32.mrb[0].mxu0
        %v787 = vadd.f32 %v495, %v786
        %788 = vdwg.mxu0
        %789 = vmatprep.subr.bf16.mxu0 %v584
        %790 = vmatpush1.bf16.msra.mxu0 %v583
        %791 = vmatprep.subr.bf16.mxu0 %v651
        %792 = vmatpush1.bf16.msra.mxu0 %v648
        %793 = vmatprep.subr.bf16.mxu0 0
        %794 = vmatpush1.bf16.msra.mxu0 0
        %795 = vmatprep.subr.bf16.mxu0 0
        %796 = vmatpush1.bf16.msra.mxu0 0
        %797 = vmatprep.subr.bf16.mxu0 0
        %798 = vmatpush1.bf16.msra.mxu0 0
        %799 = vmatprep.subr.bf16.mxu0 0
        %800 = vmatpush1.bf16.msra.mxu0 0
        %801 = vmatprep.subr.bf16.mxu0 0
        %802 = vmatpush1.bf16.msra.mxu0 0
        %803 = vmatprep.subr.bf16.mxu0 0
        %804 = vmatpush1.bf16.msra.mxu0 0
        %805 = vmatprep.subr.bf16.mxu0 0
        %806 = vmatpush1.bf16.msra.mxu0 0
        %807 = vmatprep.subr.bf16.mxu0 0
        %808 = vmatpush1.bf16.msra.mxu0 0
        %809 = vmatprep.subr.bf16.mxu0 0
        %810 = vmatpush1.bf16.msra.mxu0 0
        %811 = vmatprep.subr.bf16.mxu0 0
        %812 = vmatpush1.bf16.msra.mxu0 0
        %813 = vmatprep.subr.bf16.mxu0 0
        %814 = vmatpush1.bf16.msra.mxu0 0
        %815 = vmatprep.subr.bf16.mxu0 0
        %816 = vmatpush1.bf16.msra.mxu0 0
        %817 = vmatprep.subr.bf16.mxu0 0
        %818 = vmatpush1.bf16.msra.mxu0 0
        %819 = vmatprep.subr.bf16.mxu0 0
        %820 = vmatpush1.bf16.msra.mxu0 0
        %821 = vmatprep.mubr.bf16.mxu0 0
        %822 = vmatmul.mubr.bf16.gmra.mrb[0].mxu0 %v629
        %v823 = vpop.f32.mrb[0].mxu0
        %v824 = vadd.f32 %v480, %v823
        %v825 = vpop.f32.mrb[0].mxu0
        %v826 = vadd.f32 %v480, %v825
        %v827 = vpop.f32.mrb[0].mxu0
        %v828 = vadd.f32 %v485, %v827
        %v829 = vpop.f32.mrb[0].mxu0
        %v830 = vadd.f32 %v485, %v829
        %831 = vmatprep.mubr.bf16.mxu0 0
        %832 = vmatmul.mubr.bf16.gmra.mrb[0].mxu0 %v632
        %v833 = vpop.f32.mrb[0].mxu0
        %v834 = vadd.f32 %v490, %v833
        %v835 = vpop.f32.mrb[0].mxu0
        %v836 = vadd.f32 %v490, %v835
        %v837 = vpop.f32.mrb[0].mxu0
        %v838 = vadd.f32 %v495, %v837
        %v839 = vpop.f32.mrb[0].mxu0
        %v840 = vadd.f32 %v495, %v839
        %841 = vdwg.mxu0
        %842 = vmatprep.subr.bf16.mxu0 %v586
        %843 = vmatpush1.bf16.msra.mxu0 %v585
        %844 = vmatprep.subr.bf16.mxu0 %v657
        %845 = vmatpush1.bf16.msra.mxu0 %v654
        %846 = vmatprep.subr.bf16.mxu0 0
        %847 = vmatpush1.bf16.msra.mxu0 0
        %848 = vmatprep.subr.bf16.mxu0 0
        %849 = vmatpush1.bf16.msra.mxu0 0
        %850 = vmatprep.subr.bf16.mxu0 0
        %851 = vmatpush1.bf16.msra.mxu0 0
        %852 = vmatprep.subr.bf16.mxu0 0
        %853 = vmatpush1.bf16.msra.mxu0 0
        %854 = vmatprep.subr.bf16.mxu0 0
        %855 = vmatpush1.bf16.msra.mxu0 0
        %856 = vmatprep.subr.bf16.mxu0 0
        %857 = vmatpush1.bf16.msra.mxu0 0
        %858 = vmatprep.subr.bf16.mxu0 0
        %859 = vmatpush1.bf16.msra.mxu0 0
        %860 = vmatprep.subr.bf16.mxu0 0
        %861 = vmatpush1.bf16.msra.mxu0 0
        %862 = vmatprep.subr.bf16.mxu0 0
        %863 = vmatpush1.bf16.msra.mxu0 0
        %864 = vmatprep.subr.bf16.mxu0 0
        %865 = vmatpush1.bf16.msra.mxu0 0
        %866 = vmatprep.subr.bf16.mxu0 0
        %867 = vmatpush1.bf16.msra.mxu0 0
        %868 = vmatprep.subr.bf16.mxu0 0
        %869 = vmatpush1.bf16.msra.mxu0 0
        %870 = vmatprep.subr.bf16.mxu0 0
        %871 = vmatpush1.bf16.msra.mxu0 0
        %872 = vmatprep.subr.bf16.mxu0 0
        %873 = vmatpush1.bf16.msra.mxu0 0
        %874 = vmatprep.mubr.bf16.mxu0 0
        %875 = vmatmul.mubr.bf16.gmra.mrb[0].mxu0 %v629
        %v876 = vpop.f32.mrb[0].mxu0
        %v877 = vadd.f32 %v480, %v876
        %v878 = vpop.f32.mrb[0].mxu0
        %v879 = vadd.f32 %v480, %v878
        %v880 = vpop.f32.mrb[0].mxu0
        %v881 = vadd.f32 %v485, %v880
        %v882 = vpop.f32.mrb[0].mxu0
        %v883 = vadd.f32 %v485, %v882
        %884 = vmatprep.mubr.bf16.mxu0 0
        %885 = vmatmul.mubr.bf16.gmra.mrb[0].mxu0 %v632
        %v886 = vpop.f32.mrb[0].mxu0
        %v887 = vadd.f32 %v490, %v886
        %v888 = vpop.f32.mrb[0].mxu0
        %v889 = vadd.f32 %v490, %v888
        %v890 = vpop.f32.mrb[0].mxu0
        %v891 = vadd.f32 %v495, %v890
        %v892 = vpop.f32.mrb[0].mxu0
        %v893 = vadd.f32 %v495, %v892
        %894 = vdwg.mxu0
        %895 = vmatprep.subr.bf16.mxu0 %v588
        %896 = vmatpush1.bf16.msra.mxu0 %v587
        %897 = vmatprep.subr.bf16.mxu0 %v663
        %898 = vmatpush1.bf16.msra.mxu0 %v660
        %899 = vmatprep.subr.bf16.mxu0 0
        %900 = vmatpush1.bf16.msra.mxu0 0
        %901 = vmatprep.subr.bf16.mxu0 0
        %902 = vmatpush1.bf16.msra.mxu0 0
        %903 = vmatprep.subr.bf16.mxu0 0
        %904 = vmatpush1.bf16.msra.mxu0 0
        %905 = vmatprep.subr.bf16.mxu0 0
        %906 = vmatpush1.bf16.msra.mxu0 0
        %907 = vmatprep.subr.bf16.mxu0 0
        %908 = vmatpush1.bf16.msra.mxu0 0
        %909 = vmatprep.subr.bf16.mxu0 0
        %910 = vmatpush1.bf16.msra.mxu0 0
        %911 = vmatprep.subr.bf16.mxu0 0
        %912 = vmatpush1.bf16.msra.mxu0 0
        %913 = vmatprep.subr.bf16.mxu0 0
        %914 = vmatpush1.bf16.msra.mxu0 0
        %915 = vmatprep.subr.bf16.mxu0 0
        %916 = vmatpush1.bf16.msra.mxu0 0
        %917 = vmatprep.subr.bf16.mxu0 0
        %918 = vmatpush1.bf16.msra.mxu0 0
        %919 = vmatprep.subr.bf16.mxu0 0
        %920 = vmatpush1.bf16.msra.mxu0 0
        %921 = vmatprep.subr.bf16.mxu0 0
        %922 = vmatpush1.bf16.msra.mxu0 0
        %923 = vmatprep.subr.bf16.mxu0 0
        %924 = vmatpush1.bf16.msra.mxu0 0
        %925 = vmatprep.subr.bf16.mxu0 0
        %926 = vmatpush1.bf16.msra.mxu0 0
        %927 = vmatprep.mubr.bf16.mxu0 0
        %928 = vmatmul.mubr.bf16.gmra.mrb[0].mxu0 %v629
        %v929 = vpop.f32.mrb[0].mxu0
        %v930 = vadd.f32 %v480, %v929
        %v931 = vpop.f32.mrb[0].mxu0
        %v932 = vadd.f32 %v480, %v931
        %v933 = vpop.f32.mrb[0].mxu0
        %v934 = vadd.f32 %v485, %v933
        %v935 = vpop.f32.mrb[0].mxu0
        %v936 = vadd.f32 %v485, %v935
        %937 = vmatprep.mubr.bf16.mxu0 0
        %938 = vmatmul.mubr.bf16.gmra.mrb[0].mxu0 %v632
        %v939 = vpop.f32.mrb[0].mxu0
        %v940 = vadd.f32 %v490, %v939
        %v941 = vpop.f32.mrb[0].mxu0
        %v942 = vadd.f32 %v490, %v941
        %v943 = vpop.f32.mrb[0].mxu0
        %v944 = vadd.f32 %v495, %v943
        %v945 = vpop.f32.mrb[0].mxu0
        %v946 = vadd.f32 %v495, %v945
        %947 = vdwg.mxu0
        %948 = vmatprep.subr.bf16.mxu0 %v590
        %949 = vmatpush1.bf16.msra.mxu0 %v589
        %950 = vmatprep.subr.bf16.mxu0 %v669
        %951 = vmatpush1.bf16.msra.mxu0 %v666
        %952 = vmatprep.subr.bf16.mxu0 0
        %953 = vmatpush1.bf16.msra.mxu0 0
        %954 = vmatprep.subr.bf16.mxu0 0
        %955 = vmatpush1.bf16.msra.mxu0 0
        %956 = vmatprep.subr.bf16.mxu0 0
        %957 = vmatpush1.bf16.msra.mxu0 0
        %958 = vmatprep.subr.bf16.mxu0 0
        %959 = vmatpush1.bf16.msra.mxu0 0
        %960 = vmatprep.subr.bf16.mxu0 0
        %961 = vmatpush1.bf16.msra.mxu0 0
        %962 = vmatprep.subr.bf16.mxu0 0
        %963 = vmatpush1.bf16.msra.mxu0 0
        %964 = vmatprep.subr.bf16.mxu0 0
        %965 = vmatpush1.bf16.msra.mxu0 0
        %966 = vmatprep.subr.bf16.mxu0 0
        %967 = vmatpush1.bf16.msra.mxu0 0
        %968 = vmatprep.subr.bf16.mxu0 0
        %969 = vmatpush1.bf16.msra.mxu0 0
        %970 = vmatprep.subr.bf16.mxu0 0
        %971 = vmatpush1.bf16.msra.mxu0 0
        %972 = vmatprep.subr.bf16.mxu0 0
        %973 = vmatpush1.bf16.msra.mxu0 0
        %974 = vmatprep.subr.bf16.mxu0 0
        %975 = vmatpush1.bf16.msra.mxu0 0
        %976 = vmatprep.subr.bf16.mxu0 0
        %977 = vmatpush1.bf16.msra.mxu0 0
        %978 = vmatprep.subr.bf16.mxu0 0
        %979 = vmatpush1.bf16.msra.mxu0 0
        %980 = vmatprep.mubr.bf16.mxu0 0
        %981 = vmatmul.mubr.bf16.gmra.mrb[0].mxu0 %v629
        %v982 = vpop.f32.mrb[0].mxu0
        %v983 = vadd.f32 %v480, %v982
        %v984 = vpop.f32.mrb[0].mxu0
        %v985 = vadd.f32 %v480, %v984
        %v986 = vpop.f32.mrb[0].mxu0
        %v987 = vadd.f32 %v485, %v986
        %v988 = vpop.f32.mrb[0].mxu0
        %v989 = vadd.f32 %v485, %v988
        %990 = vmatprep.mubr.bf16.mxu0 0
        %991 = vmatmul.mubr.bf16.gmra.mrb[0].mxu0 %v632
        %v992 = vpop.f32.mrb[0].mxu0
        %v993 = vadd.f32 %v490, %v992
        %v994 = vpop.f32.mrb[0].mxu0
        %v995 = vadd.f32 %v490, %v994
        %v996 = vpop.f32.mrb[0].mxu0
        %v997 = vadd.f32 %v495, %v996
        %v998 = vpop.f32.mrb[0].mxu0
        %v999 = vadd.f32 %v495, %v998
        %1000 = vdwg.mxu0
        %1001 = vmatprep.subr.bf16.mxu0 %v592
        %1002 = vmatpush1.bf16.msra.mxu0 %v591
        %1003 = vmatprep.subr.bf16.mxu0 %v675
        %1004 = vmatpush1.bf16.msra.mxu0 %v672
        %1005 = vmatprep.subr.bf16.mxu0 0
        %1006 = vmatpush1.bf16.msra.mxu0 0
        %1007 = vmatprep.subr.bf16.mxu0 0
        %1008 = vmatpush1.bf16.msra.mxu0 0
        %1009 = vmatprep.subr.bf16.mxu0 0
        %1010 = vmatpush1.bf16.msra.mxu0 0
        %1011 = vmatprep.subr.bf16.mxu0 0
        %1012 = vmatpush1.bf16.msra.mxu0 0
        %1013 = vmatprep.subr.bf16.mxu0 0
        %1014 = vmatpush1.bf16.msra.mxu0 0
        %1015 = vmatprep.subr.bf16.mxu0 0
        %1016 = vmatpush1.bf16.msra.mxu0 0
        %1017 = vmatprep.subr.bf16.mxu0 0
        %1018 = vmatpush1.bf16.msra.mxu0 0
        %1019 = vmatprep.subr.bf16.mxu0 0
        %1020 = vmatpush1.bf16.msra.mxu0 0
        %1021 = vmatprep.subr.bf16.mxu0 0
        %1022 = vmatpush1.bf16.msra.mxu0 0
        %1023 = vmatprep.subr.bf16.mxu0 0
        %1024 = vmatpush1.bf16.msra.mxu0 0
        %1025 = vmatprep.subr.bf16.mxu0 0
        %1026 = vmatpush1.bf16.msra.mxu0 0
        %1027 = vmatprep.subr.bf16.mxu0 0
        %1028 = vmatpush1.bf16.msra.mxu0 0
        %1029 = vmatprep.subr.bf16.mxu0 0
        %1030 = vmatpush1.bf16.msra.mxu0 0
        %1031 = vmatprep.subr.bf16.mxu0 0
        %1032 = vmatpush1.bf16.msra.mxu0 0
        %1033 = vmatprep.mubr.bf16.mxu0 0
        %1034 = vmatmul.mubr.bf16.gmra.mrb[0].mxu0 %v629
        %v1035 = vpop.f32.mrb[0].mxu0
        %v1036 = vadd.f32 %v480, %v1035
        %v1037 = vpop.f32.mrb[0].mxu0
        %v1038 = vadd.f32 %v480, %v1037
        %v1039 = vpop.f32.mrb[0].mxu0
        %v1040 = vadd.f32 %v485, %v1039
        %v1041 = vpop.f32.mrb[0].mxu0
        %v1042 = vadd.f32 %v485, %v1041
        %1043 = vmatprep.mubr.bf16.mxu0 0
        %1044 = vmatmul.mubr.bf16.gmra.mrb[0].mxu0 %v632
        %v1045 = vpop.f32.mrb[0].mxu0
        %v1046 = vadd.f32 %v490, %v1045
        %v1047 = vpop.f32.mrb[0].mxu0
        %v1048 = vadd.f32 %v490, %v1047
        %v1049 = vpop.f32.mrb[0].mxu0
        %v1050 = vadd.f32 %v495, %v1049
        %v1051 = vpop.f32.mrb[0].mxu0
        %v1052 = vadd.f32 %v495, %v1051
        %1053 = vdwg.mxu0
        %1054 = vmatprep.subr.bf16.mxu0 %v594
        %1055 = vmatpush1.bf16.msra.mxu0 %v593
        %1056 = vmatprep.subr.bf16.mxu0 %v681
        %1057 = vmatpush1.bf16.msra.mxu0 %v678
        %1058 = vmatprep.subr.bf16.mxu0 0
        %1059 = vmatpush1.bf16.msra.mxu0 0
        %1060 = vmatprep.subr.bf16.mxu0 0
        %1061 = vmatpush1.bf16.msra.mxu0 0
        %1062 = vmatprep.subr.bf16.mxu0 0
        %1063 = vmatpush1.bf16.msra.mxu0 0
        %1064 = vmatprep.subr.bf16.mxu0 0
        %1065 = vmatpush1.bf16.msra.mxu0 0
        %1066 = vmatprep.subr.bf16.mxu0 0
        %1067 = vmatpush1.bf16.msra.mxu0 0
        %1068 = vmatprep.subr.bf16.mxu0 0
        %1069 = vmatpush1.bf16.msra.mxu0 0
        %1070 = vmatprep.subr.bf16.mxu0 0
        %1071 = vmatpush1.bf16.msra.mxu0 0
        %1072 = vmatprep.subr.bf16.mxu0 0
        %1073 = vmatpush1.bf16.msra.mxu0 0
        %1074 = vmatprep.subr.bf16.mxu0 0
        %1075 = vmatpush1.bf16.msra.mxu0 0
        %1076 = vmatprep.subr.bf16.mxu0 0
        %1077 = vmatpush1.bf16.msra.mxu0 0
        %1078 = vmatprep.subr.bf16.mxu0 0
        %1079 = vmatpush1.bf16.msra.mxu0 0
        %1080 = vmatprep.subr.bf16.mxu0 0
        %1081 = vmatpush1.bf16.msra.mxu0 0
        %1082 = vmatprep.subr.bf16.mxu0 0
        %1083 = vmatpush1.bf16.msra.mxu0 0
        %1084 = vmatprep.subr.bf16.mxu0 0
        %1085 = vmatpush1.bf16.msra.mxu0 0
        %1086 = vmatprep.mubr.bf16.mxu0 0
        %1087 = vmatmul.mubr.bf16.gmra.mrb[0].mxu0 %v629
        %v1088 = vpop.f32.mrb[0].mxu0
        %v1089 = vadd.f32 %v480, %v1088
        %v1090 = vpop.f32.mrb[0].mxu0
        %v1091 = vadd.f32 %v480, %v1090
        %v1092 = vpop.f32.mrb[0].mxu0
        %v1093 = vadd.f32 %v485, %v1092
        %v1094 = vpop.f32.mrb[0].mxu0
        %v1095 = vadd.f32 %v485, %v1094
        %1096 = vmatprep.mubr.bf16.mxu0 0
        %1097 = vmatmul.mubr.bf16.gmra.mrb[0].mxu0 %v632
        %v1098 = vpop.f32.mrb[0].mxu0
        %v1099 = vadd.f32 %v490, %v1098
        %v1100 = vpop.f32.mrb[0].mxu0
        %v1101 = vadd.f32 %v490, %v1100
        %v1102 = vpop.f32.mrb[0].mxu0
        %v1103 = vadd.f32 %v495, %v1102
        %v1104 = vpop.f32.mrb[0].mxu0
        %v1105 = vadd.f32 %v495, %v1104
        %1106 = vdwg.mxu0
        %v1107 = vmax.f32 %v728, 0.0
        %v1108 = vmax.f32 %v730, 0.0
        %v1109 = vmax.f32 %v781, 0.0
        %v1110 = vmax.f32 %v783, 0.0
        %v1111 = vmax.f32 %v834, 0.0
        %v1112 = vmax.f32 %v836, 0.0
        %v1113 = vmax.f32 %v887, 0.0
        %v1114 = vmax.f32 %v889, 0.0
        %v1115 = vmax.f32 %v940, 0.0
        %v1116 = vmax.f32 %v942, 0.0
        %v1117 = vmax.f32 %v993, 0.0
        %v1118 = vmax.f32 %v995, 0.0
        %v1119 = vmax.f32 %v1046, 0.0
        %v1120 = vmax.f32 %v1048, 0.0
        %v1121 = vmax.f32 %v1099, 0.0
        %v1122 = vmax.f32 %v1101, 0.0
        %v1123 = vmax.f32 %v732, 0.0
        %v1124 = vmax.f32 %v734, 0.0
        %v1125 = vmax.f32 %v785, 0.0
        %v1126 = vmax.f32 %v787, 0.0
        %v1127 = vmax.f32 %v838, 0.0
        %v1128 = vmax.f32 %v840, 0.0
        %v1129 = vmax.f32 %v891, 0.0
        %v1130 = vmax.f32 %v893, 0.0
        %v1131 = vmax.f32 %v944, 0.0
        %v1132 = vmax.f32 %v946, 0.0
        %v1133 = vmax.f32 %v997, 0.0
        %v1134 = vmax.f32 %v999, 0.0
        %v1135 = vmax.f32 %v1050, 0.0
        %v1136 = vmax.f32 %v1052, 0.0
        %v1137 = vmax.f32 %v1103, 0.0
        %v1138 = vmax.f32 %v1105, 0.0
        %v1139 = vpack.c.bf16 %v1123, %v1107
        %v1140 = vpack.c.bf16 %v1124, %v1108
        %v1141 = vpack.c.bf16 %v1125, %v1109
        %v1142 = vpack.c.bf16 %v1126, %v1110
        %v1143 = vpack.c.bf16 %v1127, %v1111
        %v1144 = vpack.c.bf16 %v1128, %v1112
        %v1145 = vpack.c.bf16 %v1129, %v1113
        %v1146 = vpack.c.bf16 %v1130, %v1114
        %v1147 = vpack.c.bf16 %v1131, %v1115
        %v1148 = vpack.c.bf16 %v1132, %v1116
        %v1149 = vpack.c.bf16 %v1133, %v1117
        %v1150 = vpack.c.bf16 %v1134, %v1118
        %v1151 = vpack.c.bf16 %v1135, %v1119
        %v1152 = vpack.c.bf16 %v1136, %v1120
        %v1153 = vpack.c.bf16 %v1137, %v1121
        %v1154 = vpack.c.bf16 %v1138, %v1122
        %v1155 = vld [vmem:[%s4] sm:$0xf]
        %v1156 = vld [vmem:[%s4 + $0x4] sm:$0xf]
        %v1157 = vld [vmem:[%s5] sm:$0xff]
        %v1158 = vld [vmem:[%s5 + $0x8] sm:$0xff]
        %1160 = vset.pattern.permute.xlu0 0
        %1161 = vperm.xlu0 %1160, %v1157
        %v1162 = vpop.permute.xlu0 %1161
        %1165 = vset.pattern.permute.xlu0 0
        %1166 = vperm.xlu0 %1165, %v1158
        %v1167 = vpop.permute.xlu0 %1166
        %v1171 = vunpack.c.l.b16 %v1155
        %v1172 = vunpack.c.l.b16 %v1156
        %v1173 = vpack.c.b16 %v1172, %v1171
        %vm1174 = vcmask 130048
        %v1176 = vsel %vm1174, %v1173, 0
        %1178 = vmatprep.subr.bf16.mxu0 %v1140
        %1179 = vmatpush1.bf16.msra.mxu0 %v1139
        %1180 = vmatprep.subr.bf16.mxu0 0
        %1181 = vmatpush1.bf16.msra.mxu0 0
        %1182 = vmatprep.subr.bf16.mxu0 0
        %1183 = vmatpush1.bf16.msra.mxu0 0
        %1184 = vmatprep.subr.bf16.mxu0 0
        %1185 = vmatpush1.bf16.msra.mxu0 0
        %1186 = vmatprep.subr.bf16.mxu0 0
        %1187 = vmatpush1.bf16.msra.mxu0 0
        %1188 = vmatprep.subr.bf16.mxu0 0
        %1189 = vmatpush1.bf16.msra.mxu0 0
        %1190 = vmatprep.subr.bf16.mxu0 0
        %1191 = vmatpush1.bf16.msra.mxu0 0
        %1192 = vmatprep.subr.bf16.mxu0 0
        %1193 = vmatpush1.bf16.msra.mxu0 0
        %1194 = vmatprep.subr.bf16.mxu0 0
        %1195 = vmatpush1.bf16.msra.mxu0 0
        %1196 = vmatprep.subr.bf16.mxu0 0
        %1197 = vmatpush1.bf16.msra.mxu0 0
        %1198 = vmatprep.subr.bf16.mxu0 0
        %1199 = vmatpush1.bf16.msra.mxu0 0
        %1200 = vmatprep.subr.bf16.mxu0 0
        %1201 = vmatpush1.bf16.msra.mxu0 0
        %1202 = vmatprep.subr.bf16.mxu0 0
        %1203 = vmatpush1.bf16.msra.mxu0 0
        %1204 = vmatprep.subr.bf16.mxu0 0
        %1205 = vmatpush1.bf16.msra.mxu0 0
        %1206 = vmatprep.subr.bf16.mxu0 0
        %1207 = vmatpush1.bf16.msra.mxu0 0
        %1208 = vmatprep.subr.bf16.mxu0 0
        %1209 = vmatpush1.bf16.msra.mxu0 0
        %1210 = vmatprep.mubr.bf16.mxu0 0
        %1211 = vmatmul.mubr.bf16.gmra.mrb[0].mxu0 %v1176
        %v1212 = vpop.f32.mrb[0].mxu0
        %v1213 = vadd.f32 %v1162, %v1212
        %v1214 = vpop.f32.mrb[0].mxu0
        %v1215 = vadd.f32 %v1162, %v1214
        %v1216 = vpop.f32.mrb[0].mxu0
        %v1217 = vadd.f32 %v1167, %v1216
        %v1218 = vpop.f32.mrb[0].mxu0
        %v1219 = vadd.f32 %v1167, %v1218
        %1220 = vdwg.mxu0
        %1221 = vmatprep.subr.bf16.mxu0 %v1142
        %1222 = vmatpush1.bf16.msra.mxu0 %v1141
        %1223 = vmatprep.subr.bf16.mxu0 0
        %1224 = vmatpush1.bf16.msra.mxu0 0
        %1225 = vmatprep.subr.bf16.mxu0 0
        %1226 = vmatpush1.bf16.msra.mxu0 0
        %1227 = vmatprep.subr.bf16.mxu0 0
        %1228 = vmatpush1.bf16.msra.mxu0 0
        %1229 = vmatprep.subr.bf16.mxu0 0
        %1230 = vmatpush1.bf16.msra.mxu0 0
        %1231 = vmatprep.subr.bf16.mxu0 0
        %1232 = vmatpush1.bf16.msra.mxu0 0
        %1233 = vmatprep.subr.bf16.mxu0 0
        %1234 = vmatpush1.bf16.msra.mxu0 0
        %1235 = vmatprep.subr.bf16.mxu0 0
        %1236 = vmatpush1.bf16.msra.mxu0 0
        %1237 = vmatprep.subr.bf16.mxu0 0
        %1238 = vmatpush1.bf16.msra.mxu0 0
        %1239 = vmatprep.subr.bf16.mxu0 0
        %1240 = vmatpush1.bf16.msra.mxu0 0
        %1241 = vmatprep.subr.bf16.mxu0 0
        %1242 = vmatpush1.bf16.msra.mxu0 0
        %1243 = vmatprep.subr.bf16.mxu0 0
        %1244 = vmatpush1.bf16.msra.mxu0 0
        %1245 = vmatprep.subr.bf16.mxu0 0
        %1246 = vmatpush1.bf16.msra.mxu0 0
        %1247 = vmatprep.subr.bf16.mxu0 0
        %1248 = vmatpush1.bf16.msra.mxu0 0
        %1249 = vmatprep.subr.bf16.mxu0 0
        %1250 = vmatpush1.bf16.msra.mxu0 0
        %1251 = vmatprep.subr.bf16.mxu0 0
        %1252 = vmatpush1.bf16.msra.mxu0 0
        %1253 = vmatprep.mubr.bf16.mxu0 0
        %1254 = vmatmul.mubr.bf16.gmra.mrb[0].mxu0 %v1176
        %v1255 = vpop.f32.mrb[0].mxu0
        %v1256 = vadd.f32 %v1162, %v1255
        %v1257 = vpop.f32.mrb[0].mxu0
        %v1258 = vadd.f32 %v1162, %v1257
        %v1259 = vpop.f32.mrb[0].mxu0
        %v1260 = vadd.f32 %v1167, %v1259
        %v1261 = vpop.f32.mrb[0].mxu0
        %v1262 = vadd.f32 %v1167, %v1261
        %1263 = vdwg.mxu0
        %1264 = vmatprep.subr.bf16.mxu0 %v1144
        %1265 = vmatpush1.bf16.msra.mxu0 %v1143
        %1266 = vmatprep.subr.bf16.mxu0 0
        %1267 = vmatpush1.bf16.msra.mxu0 0
        %1268 = vmatprep.subr.bf16.mxu0 0
        %1269 = vmatpush1.bf16.msra.mxu0 0
        %1270 = vmatprep.subr.bf16.mxu0 0
        %1271 = vmatpush1.bf16.msra.mxu0 0
        %1272 = vmatprep.subr.bf16.mxu0 0
        %1273 = vmatpush1.bf16.msra.mxu0 0
        %1274 = vmatprep.subr.bf16.mxu0 0
        %1275 = vmatpush1.bf16.msra.mxu0 0
        %1276 = vmatprep.subr.bf16.mxu0 0
        %1277 = vmatpush1.bf16.msra.mxu0 0
        %1278 = vmatprep.subr.bf16.mxu0 0
        %1279 = vmatpush1.bf16.msra.mxu0 0
        %1280 = vmatprep.subr.bf16.mxu0 0
        %1281 = vmatpush1.bf16.msra.mxu0 0
        %1282 = vmatprep.subr.bf16.mxu0 0
        %1283 = vmatpush1.bf16.msra.mxu0 0
        %1284 = vmatprep.subr.bf16.mxu0 0
        %1285 = vmatpush1.bf16.msra.mxu0 0
        %1286 = vmatprep.subr.bf16.mxu0 0
        %1287 = vmatpush1.bf16.msra.mxu0 0
        %1288 = vmatprep.subr.bf16.mxu0 0
        %1289 = vmatpush1.bf16.msra.mxu0 0
        %1290 = vmatprep.subr.bf16.mxu0 0
        %1291 = vmatpush1.bf16.msra.mxu0 0
        %1292 = vmatprep.subr.bf16.mxu0 0
        %1293 = vmatpush1.bf16.msra.mxu0 0
        %1294 = vmatprep.subr.bf16.mxu0 0
        %1295 = vmatpush1.bf16.msra.mxu0 0
        %1296 = vmatprep.mubr.bf16.mxu0 0
        %1297 = vmatmul.mubr.bf16.gmra.mrb[0].mxu0 %v1176
        %v1298 = vpop.f32.mrb[0].mxu0
        %v1299 = vadd.f32 %v1162, %v1298
        %v1300 = vpop.f32.mrb[0].mxu0
        %v1301 = vadd.f32 %v1162, %v1300
        %v1302 = vpop.f32.mrb[0].mxu0
        %v1303 = vadd.f32 %v1167, %v1302
        %v1304 = vpop.f32.mrb[0].mxu0
        %v1305 = vadd.f32 %v1167, %v1304
        %1306 = vdwg.mxu0
        %1307 = vmatprep.subr.bf16.mxu0 %v1146
        %1308 = vmatpush1.bf16.msra.mxu0 %v1145
        %1309 = vmatprep.subr.bf16.mxu0 0
        %1310 = vmatpush1.bf16.msra.mxu0 0
        %1311 = vmatprep.subr.bf16.mxu0 0
        %1312 = vmatpush1.bf16.msra.mxu0 0
        %1313 = vmatprep.subr.bf16.mxu0 0
        %1314 = vmatpush1.bf16.msra.mxu0 0
        %1315 = vmatprep.subr.bf16.mxu0 0
        %1316 = vmatpush1.bf16.msra.mxu0 0
        %1317 = vmatprep.subr.bf16.mxu0 0
        %1318 = vmatpush1.bf16.msra.mxu0 0
        %1319 = vmatprep.subr.bf16.mxu0 0
        %1320 = vmatpush1.bf16.msra.mxu0 0
        %1321 = vmatprep.subr.bf16.mxu0 0
        %1322 = vmatpush1.bf16.msra.mxu0 0
        %1323 = vmatprep.subr.bf16.mxu0 0
        %1324 = vmatpush1.bf16.msra.mxu0 0
        %1325 = vmatprep.subr.bf16.mxu0 0
        %1326 = vmatpush1.bf16.msra.mxu0 0
        %1327 = vmatprep.subr.bf16.mxu0 0
        %1328 = vmatpush1.bf16.msra.mxu0 0
        %1329 = vmatprep.subr.bf16.mxu0 0
        %1330 = vmatpush1.bf16.msra.mxu0 0
        %1331 = vmatprep.subr.bf16.mxu0 0
        %1332 = vmatpush1.bf16.msra.mxu0 0
        %1333 = vmatprep.subr.bf16.mxu0 0
        %1334 = vmatpush1.bf16.msra.mxu0 0
        %1335 = vmatprep.subr.bf16.mxu0 0
        %1336 = vmatpush1.bf16.msra.mxu0 0
        %1337 = vmatprep.subr.bf16.mxu0 0
        %1338 = vmatpush1.bf16.msra.mxu0 0
        %1339 = vmatprep.mubr.bf16.mxu0 0
        %1340 = vmatmul.mubr.bf16.gmra.mrb[0].mxu0 %v1176
        %v1341 = vpop.f32.mrb[0].mxu0
        %v1342 = vadd.f32 %v1162, %v1341
        %v1343 = vpop.f32.mrb[0].mxu0
        %v1344 = vadd.f32 %v1162, %v1343
        %v1345 = vpop.f32.mrb[0].mxu0
        %v1346 = vadd.f32 %v1167, %v1345
        %v1347 = vpop.f32.mrb[0].mxu0
        %v1348 = vadd.f32 %v1167, %v1347
        %1349 = vdwg.mxu0
        %1350 = vmatprep.subr.bf16.mxu0 %v1148
        %1351 = vmatpush1.bf16.msra.mxu0 %v1147
        %1352 = vmatprep.subr.bf16.mxu0 0
        %1353 = vmatpush1.bf16.msra.mxu0 0
        %1354 = vmatprep.subr.bf16.mxu0 0
        %1355 = vmatpush1.bf16.msra.mxu0 0
        %1356 = vmatprep.subr.bf16.mxu0 0
        %1357 = vmatpush1.bf16.msra.mxu0 0
        %1358 = vmatprep.subr.bf16.mxu0 0
        %1359 = vmatpush1.bf16.msra.mxu0 0
        %1360 = vmatprep.subr.bf16.mxu0 0
        %1361 = vmatpush1.bf16.msra.mxu0 0
        %1362 = vmatprep.subr.bf16.mxu0 0
        %1363 = vmatpush1.bf16.msra.mxu0 0
        %1364 = vmatprep.subr.bf16.mxu0 0
        %1365 = vmatpush1.bf16.msra.mxu0 0
        %1366 = vmatprep.subr.bf16.mxu0 0
        %1367 = vmatpush1.bf16.msra.mxu0 0
        %1368 = vmatprep.subr.bf16.mxu0 0
        %1369 = vmatpush1.bf16.msra.mxu0 0
        %1370 = vmatprep.subr.bf16.mxu0 0
        %1371 = vmatpush1.bf16.msra.mxu0 0
        %1372 = vmatprep.subr.bf16.mxu0 0
        %1373 = vmatpush1.bf16.msra.mxu0 0
        %1374 = vmatprep.subr.bf16.mxu0 0
        %1375 = vmatpush1.bf16.msra.mxu0 0
        %1376 = vmatprep.subr.bf16.mxu0 0
        %1377 = vmatpush1.bf16.msra.mxu0 0
        %1378 = vmatprep.subr.bf16.mxu0 0
        %1379 = vmatpush1.bf16.msra.mxu0 0
        %1380 = vmatprep.subr.bf16.mxu0 0
        %1381 = vmatpush1.bf16.msra.mxu0 0
        %1382 = vmatprep.mubr.bf16.mxu0 0
        %1383 = vmatmul.mubr.bf16.gmra.mrb[0].mxu0 %v1176
        %v1384 = vpop.f32.mrb[0].mxu0
        %v1385 = vadd.f32 %v1162, %v1384
        %v1386 = vpop.f32.mrb[0].mxu0
        %v1387 = vadd.f32 %v1162, %v1386
        %v1388 = vpop.f32.mrb[0].mxu0
        %v1389 = vadd.f32 %v1167, %v1388
        %v1390 = vpop.f32.mrb[0].mxu0
        %v1391 = vadd.f32 %v1167, %v1390
        %1392 = vdwg.mxu0
        %1393 = vmatprep.subr.bf16.mxu0 %v1150
        %1394 = vmatpush1.bf16.msra.mxu0 %v1149
        %1395 = vmatprep.subr.bf16.mxu0 0
        %1396 = vmatpush1.bf16.msra.mxu0 0
        %1397 = vmatprep.subr.bf16.mxu0 0
        %1398 = vmatpush1.bf16.msra.mxu0 0
        %1399 = vmatprep.subr.bf16.mxu0 0
        %1400 = vmatpush1.bf16.msra.mxu0 0
        %1401 = vmatprep.subr.bf16.mxu0 0
        %1402 = vmatpush1.bf16.msra.mxu0 0
        %1403 = vmatprep.subr.bf16.mxu0 0
        %1404 = vmatpush1.bf16.msra.mxu0 0
        %1405 = vmatprep.subr.bf16.mxu0 0
        %1406 = vmatpush1.bf16.msra.mxu0 0
        %1407 = vmatprep.subr.bf16.mxu0 0
        %1408 = vmatpush1.bf16.msra.mxu0 0
        %1409 = vmatprep.subr.bf16.mxu0 0
        %1410 = vmatpush1.bf16.msra.mxu0 0
        %1411 = vmatprep.subr.bf16.mxu0 0
        %1412 = vmatpush1.bf16.msra.mxu0 0
        %1413 = vmatprep.subr.bf16.mxu0 0
        %1414 = vmatpush1.bf16.msra.mxu0 0
        %1415 = vmatprep.subr.bf16.mxu0 0
        %1416 = vmatpush1.bf16.msra.mxu0 0
        %1417 = vmatprep.subr.bf16.mxu0 0
        %1418 = vmatpush1.bf16.msra.mxu0 0
        %1419 = vmatprep.subr.bf16.mxu0 0
        %1420 = vmatpush1.bf16.msra.mxu0 0
        %1421 = vmatprep.subr.bf16.mxu0 0
        %1422 = vmatpush1.bf16.msra.mxu0 0
        %1423 = vmatprep.subr.bf16.mxu0 0
        %1424 = vmatpush1.bf16.msra.mxu0 0
        %1425 = vmatprep.mubr.bf16.mxu0 0
        %1426 = vmatmul.mubr.bf16.gmra.mrb[0].mxu0 %v1176
        %v1427 = vpop.f32.mrb[0].mxu0
        %v1428 = vadd.f32 %v1162, %v1427
        %v1429 = vpop.f32.mrb[0].mxu0
        %v1430 = vadd.f32 %v1162, %v1429
        %v1431 = vpop.f32.mrb[0].mxu0
        %v1432 = vadd.f32 %v1167, %v1431
        %v1433 = vpop.f32.mrb[0].mxu0
        %v1434 = vadd.f32 %v1167, %v1433
        %1435 = vdwg.mxu0
        %1436 = vmatprep.subr.bf16.mxu0 %v1152
        %1437 = vmatpush1.bf16.msra.mxu0 %v1151
        %1438 = vmatprep.subr.bf16.mxu0 0
        %1439 = vmatpush1.bf16.msra.mxu0 0
        %1440 = vmatprep.subr.bf16.mxu0 0
        %1441 = vmatpush1.bf16.msra.mxu0 0
        %1442 = vmatprep.subr.bf16.mxu0 0
        %1443 = vmatpush1.bf16.msra.mxu0 0
        %1444 = vmatprep.subr.bf16.mxu0 0
        %1445 = vmatpush1.bf16.msra.mxu0 0
        %1446 = vmatprep.subr.bf16.mxu0 0
        %1447 = vmatpush1.bf16.msra.mxu0 0
        %1448 = vmatprep.subr.bf16.mxu0 0
        %1449 = vmatpush1.bf16.msra.mxu0 0
        %1450 = vmatprep.subr.bf16.mxu0 0
        %1451 = vmatpush1.bf16.msra.mxu0 0
        %1452 = vmatprep.subr.bf16.mxu0 0
        %1453 = vmatpush1.bf16.msra.mxu0 0
        %1454 = vmatprep.subr.bf16.mxu0 0
        %1455 = vmatpush1.bf16.msra.mxu0 0
        %1456 = vmatprep.subr.bf16.mxu0 0
        %1457 = vmatpush1.bf16.msra.mxu0 0
        %1458 = vmatprep.subr.bf16.mxu0 0
        %1459 = vmatpush1.bf16.msra.mxu0 0
        %1460 = vmatprep.subr.bf16.mxu0 0
        %1461 = vmatpush1.bf16.msra.mxu0 0
        %1462 = vmatprep.subr.bf16.mxu0 0
        %1463 = vmatpush1.bf16.msra.mxu0 0
        %1464 = vmatprep.subr.bf16.mxu0 0
        %1465 = vmatpush1.bf16.msra.mxu0 0
        %1466 = vmatprep.subr.bf16.mxu0 0
        %1467 = vmatpush1.bf16.msra.mxu0 0
        %1468 = vmatprep.mubr.bf16.mxu0 0
        %1469 = vmatmul.mubr.bf16.gmra.mrb[0].mxu0 %v1176
        %v1470 = vpop.f32.mrb[0].mxu0
        %v1471 = vadd.f32 %v1162, %v1470
        %v1472 = vpop.f32.mrb[0].mxu0
        %v1473 = vadd.f32 %v1162, %v1472
        %v1474 = vpop.f32.mrb[0].mxu0
        %v1475 = vadd.f32 %v1167, %v1474
        %v1476 = vpop.f32.mrb[0].mxu0
        %v1477 = vadd.f32 %v1167, %v1476
        %1478 = vdwg.mxu0
        %1479 = vmatprep.subr.bf16.mxu0 %v1154
        %1480 = vmatpush1.bf16.msra.mxu0 %v1153
        %1481 = vmatprep.subr.bf16.mxu0 0
        %1482 = vmatpush1.bf16.msra.mxu0 0
        %1483 = vmatprep.subr.bf16.mxu0 0
        %1484 = vmatpush1.bf16.msra.mxu0 0
        %1485 = vmatprep.subr.bf16.mxu0 0
        %1486 = vmatpush1.bf16.msra.mxu0 0
        %1487 = vmatprep.subr.bf16.mxu0 0
        %1488 = vmatpush1.bf16.msra.mxu0 0
        %1489 = vmatprep.subr.bf16.mxu0 0
        %1490 = vmatpush1.bf16.msra.mxu0 0
        %1491 = vmatprep.subr.bf16.mxu0 0
        %1492 = vmatpush1.bf16.msra.mxu0 0
        %1493 = vmatprep.subr.bf16.mxu0 0
        %1494 = vmatpush1.bf16.msra.mxu0 0
        %1495 = vmatprep.subr.bf16.mxu0 0
        %1496 = vmatpush1.bf16.msra.mxu0 0
        %1497 = vmatprep.subr.bf16.mxu0 0
        %1498 = vmatpush1.bf16.msra.mxu0 0
        %1499 = vmatprep.subr.bf16.mxu0 0
        %1500 = vmatpush1.bf16.msra.mxu0 0
        %1501 = vmatprep.subr.bf16.mxu0 0
        %1502 = vmatpush1.bf16.msra.mxu0 0
        %1503 = vmatprep.subr.bf16.mxu0 0
        %1504 = vmatpush1.bf16.msra.mxu0 0
        %1505 = vmatprep.subr.bf16.mxu0 0
        %1506 = vmatpush1.bf16.msra.mxu0 0
        %1507 = vmatprep.subr.bf16.mxu0 0
        %1508 = vmatpush1.bf16.msra.mxu0 0
        %1509 = vmatprep.subr.bf16.mxu0 0
        %1510 = vmatpush1.bf16.msra.mxu0 0
        %1511 = vmatprep.mubr.bf16.mxu0 0
        %1512 = vmatmul.mubr.bf16.gmra.mrb[0].mxu0 %v1176
        %v1513 = vpop.f32.mrb[0].mxu0
        %v1514 = vadd.f32 %v1162, %v1513
        %v1515 = vpop.f32.mrb[0].mxu0
        %v1516 = vadd.f32 %v1162, %v1515
        %v1517 = vpop.f32.mrb[0].mxu0
        %v1518 = vadd.f32 %v1167, %v1517
        %v1519 = vpop.f32.mrb[0].mxu0
        %v1520 = vadd.f32 %v1167, %v1519
        %1521 = vdwg.mxu0
        %v1522 = vmax.f32 %v718, %v771
        %v1523 = vmax.f32 %v720, %v773
        %v1524 = vmax.f32 %v722, %v775
        %v1525 = vmax.f32 %v724, %v777
        %v1526 = vmax.f32 %v1522, %v824
        %v1527 = vmax.f32 %v1523, %v826
        %v1528 = vmax.f32 %v1524, %v828
        %v1529 = vmax.f32 %v1525, %v830
        %v1530 = vmax.f32 %v1526, %v877
        %v1531 = vmax.f32 %v1527, %v879
        %v1532 = vmax.f32 %v1528, %v881
        %v1533 = vmax.f32 %v1529, %v883
        %v1534 = vmax.f32 %v1530, %v930
        %v1535 = vmax.f32 %v1531, %v932
        %v1536 = vmax.f32 %v1532, %v934
        %v1537 = vmax.f32 %v1533, %v936
        %v1538 = vmax.f32 %v1534, %v983
        %v1539 = vmax.f32 %v1535, %v985
        %v1540 = vmax.f32 %v1536, %v987
        %v1541 = vmax.f32 %v1537, %v989
        %v1542 = vmax.f32 %v1538, %v1036
        %v1543 = vmax.f32 %v1539, %v1038
        %v1544 = vmax.f32 %v1540, %v1040
        %v1545 = vmax.f32 %v1541, %v1042
        %v1546 = vmax.f32 %v1542, %v1089
        %v1547 = vmax.f32 %v1543, %v1091
        %v1548 = vmax.f32 %v1544, %v1093
        %v1549 = vmax.f32 %v1545, %v1095
        %v1550 = vsub.f32 %v718, %v1546
        %v1551 = vsub.f32 %v720, %v1547
        %v1552 = vsub.f32 %v722, %v1548
        %v1553 = vsub.f32 %v724, %v1549
        %v1554 = vmul.f32 %v1550, 1.442695
        %v1555 = vpow.pop %v1554
        %v1556 = vmul.f32 %v1551, 1.442695
        %v1557 = vpow.pop %v1556
        %v1558 = vmul.f32 %v1552, 1.442695
        %v1559 = vpow.pop %v1558
        %v1560 = vmul.f32 %v1553, 1.442695
        %v1561 = vpow.pop %v1560
        %v1562 = vadd.f32 %v1555, 0.0
        %v1563 = vadd.f32 %v1557, 0.0
        %v1564 = vadd.f32 %v1559, 0.0
        %v1565 = vadd.f32 %v1561, 0.0
        %v1566 = vmul.f32 %v1555, %v1213
        %v1567 = vmul.f32 %v1557, %v1215
        %v1568 = vmul.f32 %v1559, %v1217
        %v1569 = vmul.f32 %v1561, %v1219
        %v1570 = vadd.f32 %v1566, 0.0
        %v1571 = vadd.f32 %v1567, 0.0
        %v1572 = vadd.f32 %v1568, 0.0
        %v1573 = vadd.f32 %v1569, 0.0
        %v1574 = vsub.f32 %v771, %v1546
        %v1575 = vsub.f32 %v773, %v1547
        %v1576 = vsub.f32 %v775, %v1548
        %v1577 = vsub.f32 %v777, %v1549
        %v1578 = vmul.f32 %v1574, 1.442695
        %v1579 = vpow.pop %v1578
        %v1580 = vmul.f32 %v1575, 1.442695
        %v1581 = vpow.pop %v1580
        %v1582 = vmul.f32 %v1576, 1.442695
        %v1583 = vpow.pop %v1582
        %v1584 = vmul.f32 %v1577, 1.442695
        %v1585 = vpow.pop %v1584
        %v1586 = vadd.f32 %v1562, %v1579
        %v1587 = vadd.f32 %v1563, %v1581
        %v1588 = vadd.f32 %v1564, %v1583
        %v1589 = vadd.f32 %v1565, %v1585
        %v1590 = vmul.f32 %v1579, %v1256
        %v1591 = vmul.f32 %v1581, %v1258
        %v1592 = vmul.f32 %v1583, %v1260
        %v1593 = vmul.f32 %v1585, %v1262
        %v1594 = vadd.f32 %v1570, %v1590
        %v1595 = vadd.f32 %v1571, %v1591
        %v1596 = vadd.f32 %v1572, %v1592
        %v1597 = vadd.f32 %v1573, %v1593
        %v1598 = vsub.f32 %v824, %v1546
        %v1599 = vsub.f32 %v826, %v1547
        %v1600 = vsub.f32 %v828, %v1548
        %v1601 = vsub.f32 %v830, %v1549
        %v1602 = vmul.f32 %v1598, 1.442695
        %v1603 = vpow.pop %v1602
        %v1604 = vmul.f32 %v1599, 1.442695
        %v1605 = vpow.pop %v1604
        %v1606 = vmul.f32 %v1600, 1.442695
        %v1607 = vpow.pop %v1606
        %v1608 = vmul.f32 %v1601, 1.442695
        %v1609 = vpow.pop %v1608
        %v1610 = vadd.f32 %v1586, %v1603
        %v1611 = vadd.f32 %v1587, %v1605
        %v1612 = vadd.f32 %v1588, %v1607
        %v1613 = vadd.f32 %v1589, %v1609
        %v1614 = vmul.f32 %v1603, %v1299
        %v1615 = vmul.f32 %v1605, %v1301
        %v1616 = vmul.f32 %v1607, %v1303
        %v1617 = vmul.f32 %v1609, %v1305
        %v1618 = vadd.f32 %v1594, %v1614
        %v1619 = vadd.f32 %v1595, %v1615
        %v1620 = vadd.f32 %v1596, %v1616
        %v1621 = vadd.f32 %v1597, %v1617
        %v1622 = vsub.f32 %v877, %v1546
        %v1623 = vsub.f32 %v879, %v1547
        %v1624 = vsub.f32 %v881, %v1548
        %v1625 = vsub.f32 %v883, %v1549
        %v1626 = vmul.f32 %v1622, 1.442695
        %v1627 = vpow.pop %v1626
        %v1628 = vmul.f32 %v1623, 1.442695
        %v1629 = vpow.pop %v1628
        %v1630 = vmul.f32 %v1624, 1.442695
        %v1631 = vpow.pop %v1630
        %v1632 = vmul.f32 %v1625, 1.442695
        %v1633 = vpow.pop %v1632
        %v1634 = vadd.f32 %v1610, %v1627
        %v1635 = vadd.f32 %v1611, %v1629
        %v1636 = vadd.f32 %v1612, %v1631
        %v1637 = vadd.f32 %v1613, %v1633
        %v1638 = vmul.f32 %v1627, %v1342
        %v1639 = vmul.f32 %v1629, %v1344
        %v1640 = vmul.f32 %v1631, %v1346
        %v1641 = vmul.f32 %v1633, %v1348
        %v1642 = vadd.f32 %v1618, %v1638
        %v1643 = vadd.f32 %v1619, %v1639
        %v1644 = vadd.f32 %v1620, %v1640
        %v1645 = vadd.f32 %v1621, %v1641
        %v1646 = vsub.f32 %v930, %v1546
        %v1647 = vsub.f32 %v932, %v1547
        %v1648 = vsub.f32 %v934, %v1548
        %v1649 = vsub.f32 %v936, %v1549
        %v1650 = vmul.f32 %v1646, 1.442695
        %v1651 = vpow.pop %v1650
        %v1652 = vmul.f32 %v1647, 1.442695
        %v1653 = vpow.pop %v1652
        %v1654 = vmul.f32 %v1648, 1.442695
        %v1655 = vpow.pop %v1654
        %v1656 = vmul.f32 %v1649, 1.442695
        %v1657 = vpow.pop %v1656
        %v1658 = vadd.f32 %v1634, %v1651
        %v1659 = vadd.f32 %v1635, %v1653
        %v1660 = vadd.f32 %v1636, %v1655
        %v1661 = vadd.f32 %v1637, %v1657
        %v1662 = vmul.f32 %v1651, %v1385
        %v1663 = vmul.f32 %v1653, %v1387
        %v1664 = vmul.f32 %v1655, %v1389
        %v1665 = vmul.f32 %v1657, %v1391
        %v1666 = vadd.f32 %v1642, %v1662
        %v1667 = vadd.f32 %v1643, %v1663
        %v1668 = vadd.f32 %v1644, %v1664
        %v1669 = vadd.f32 %v1645, %v1665
        %v1670 = vsub.f32 %v983, %v1546
        %v1671 = vsub.f32 %v985, %v1547
        %v1672 = vsub.f32 %v987, %v1548
        %v1673 = vsub.f32 %v989, %v1549
        %v1674 = vmul.f32 %v1670, 1.442695
        %v1675 = vpow.pop %v1674
        %v1676 = vmul.f32 %v1671, 1.442695
        %v1677 = vpow.pop %v1676
        %v1678 = vmul.f32 %v1672, 1.442695
        %v1679 = vpow.pop %v1678
        %v1680 = vmul.f32 %v1673, 1.442695
        %v1681 = vpow.pop %v1680
        %v1682 = vadd.f32 %v1658, %v1675
        %v1683 = vadd.f32 %v1659, %v1677
        %v1684 = vadd.f32 %v1660, %v1679
        %v1685 = vadd.f32 %v1661, %v1681
        %v1686 = vmul.f32 %v1675, %v1428
        %v1687 = vmul.f32 %v1677, %v1430
        %v1688 = vmul.f32 %v1679, %v1432
        %v1689 = vmul.f32 %v1681, %v1434
        %v1690 = vadd.f32 %v1666, %v1686
        %v1691 = vadd.f32 %v1667, %v1687
        %v1692 = vadd.f32 %v1668, %v1688
        %v1693 = vadd.f32 %v1669, %v1689
        %v1694 = vsub.f32 %v1036, %v1546
        %v1695 = vsub.f32 %v1038, %v1547
        %v1696 = vsub.f32 %v1040, %v1548
        %v1697 = vsub.f32 %v1042, %v1549
        %v1698 = vmul.f32 %v1694, 1.442695
        %v1699 = vpow.pop %v1698
        %v1700 = vmul.f32 %v1695, 1.442695
        %v1701 = vpow.pop %v1700
        %v1702 = vmul.f32 %v1696, 1.442695
        %v1703 = vpow.pop %v1702
        %v1704 = vmul.f32 %v1697, 1.442695
        %v1705 = vpow.pop %v1704
        %v1706 = vadd.f32 %v1682, %v1699
        %v1707 = vadd.f32 %v1683, %v1701
        %v1708 = vadd.f32 %v1684, %v1703
        %v1709 = vadd.f32 %v1685, %v1705
        %v1710 = vmul.f32 %v1699, %v1471
        %v1711 = vmul.f32 %v1701, %v1473
        %v1712 = vmul.f32 %v1703, %v1475
        %v1713 = vmul.f32 %v1705, %v1477
        %v1714 = vadd.f32 %v1690, %v1710
        %v1715 = vadd.f32 %v1691, %v1711
        %v1716 = vadd.f32 %v1692, %v1712
        %v1717 = vadd.f32 %v1693, %v1713
        %v1718 = vsub.f32 %v1089, %v1546
        %v1719 = vsub.f32 %v1091, %v1547
        %v1720 = vsub.f32 %v1093, %v1548
        %v1721 = vsub.f32 %v1095, %v1549
        %v1722 = vmul.f32 %v1718, 1.442695
        %v1723 = vpow.pop %v1722
        %v1724 = vmul.f32 %v1719, 1.442695
        %v1725 = vpow.pop %v1724
        %v1726 = vmul.f32 %v1720, 1.442695
        %v1727 = vpow.pop %v1726
        %v1728 = vmul.f32 %v1721, 1.442695
        %v1729 = vpow.pop %v1728
        %v1730 = vadd.f32 %v1706, %v1723
        %v1731 = vadd.f32 %v1707, %v1725
        %v1732 = vadd.f32 %v1708, %v1727
        %v1733 = vadd.f32 %v1709, %v1729
        %v1734 = vmul.f32 %v1723, %v1514
        %v1735 = vmul.f32 %v1725, %v1516
        %v1736 = vmul.f32 %v1727, %v1518
        %v1737 = vmul.f32 %v1729, %v1520
        %v1738 = vadd.f32 %v1714, %v1734
        %v1739 = vadd.f32 %v1715, %v1735
        %v1740 = vadd.f32 %v1716, %v1736
        %v1741 = vadd.f32 %v1717, %v1737
        %v1742 = vrcp.pop %v1730
        %v1743 = vmul.f32 %v1738, %v1742
        %v1744 = vrcp.pop %v1731
        %v1745 = vmul.f32 %v1739, %v1744
        %v1746 = vrcp.pop %v1732
        %v1747 = vmul.f32 %v1740, %v1746
        %v1748 = vrcp.pop %v1733
        %v1749 = vmul.f32 %v1741, %v1748
        %v1750 = vadd.f32 %v1743, %v465
        %v1751 = vadd.f32 %v1745, %v466
        %v1752 = vadd.f32 %v1747, %v467
        %v1753 = vadd.f32 %v1749, %v468
        %v1754 = vmax.f32 %v1750, 0.0
        %v1755 = vmax.f32 %v1751, 0.0
        %v1756 = vmax.f32 %v1752, 0.0
        %v1757 = vmax.f32 %v1753, 0.0
        %v1758 = vld [vmem:[%s6] sm:$0xf]
        %v1759 = vld [vmem:[%s6 + $0x4] sm:$0xf]
        %v1760 = vpack.c.bf16 %v1756, %v1754
        %v1761 = vpack.c.bf16 %v1757, %v1755
        %v1762 = vld [vmem:[%s7] sm:$0xff]
        %v1763 = vld [vmem:[%s7 + $0x8] sm:$0xff]
        %1765 = vset.pattern.permute.xlu0 0
        %1766 = vperm.xlu0 %1765, %v1762
        %v1767 = vpop.permute.xlu0 %1766
        %1770 = vset.pattern.permute.xlu0 0
        %1771 = vperm.xlu0 %1770, %v1763
        %v1772 = vpop.permute.xlu0 %1771
        %v1776 = vunpack.c.l.b16 %v1758
        %v1777 = vunpack.c.l.b16 %v1759
        %v1778 = vpack.c.b16 %v1777, %v1776
        %v1780 = vsel %vm1174, %v1778, 0
        %1782 = vmatprep.subr.bf16.mxu0 %v1761
        %1783 = vmatpush1.bf16.msra.mxu0 %v1760
        %1784 = vmatprep.subr.bf16.mxu0 0
        %1785 = vmatpush1.bf16.msra.mxu0 0
        %1786 = vmatprep.subr.bf16.mxu0 0
        %1787 = vmatpush1.bf16.msra.mxu0 0
        %1788 = vmatprep.subr.bf16.mxu0 0
        %1789 = vmatpush1.bf16.msra.mxu0 0
        %1790 = vmatprep.subr.bf16.mxu0 0
        %1791 = vmatpush1.bf16.msra.mxu0 0
        %1792 = vmatprep.subr.bf16.mxu0 0
        %1793 = vmatpush1.bf16.msra.mxu0 0
        %1794 = vmatprep.subr.bf16.mxu0 0
        %1795 = vmatpush1.bf16.msra.mxu0 0
        %1796 = vmatprep.subr.bf16.mxu0 0
        %1797 = vmatpush1.bf16.msra.mxu0 0
        %1798 = vmatprep.subr.bf16.mxu0 0
        %1799 = vmatpush1.bf16.msra.mxu0 0
        %1800 = vmatprep.subr.bf16.mxu0 0
        %1801 = vmatpush1.bf16.msra.mxu0 0
        %1802 = vmatprep.subr.bf16.mxu0 0
        %1803 = vmatpush1.bf16.msra.mxu0 0
        %1804 = vmatprep.subr.bf16.mxu0 0
        %1805 = vmatpush1.bf16.msra.mxu0 0
        %1806 = vmatprep.subr.bf16.mxu0 0
        %1807 = vmatpush1.bf16.msra.mxu0 0
        %1808 = vmatprep.subr.bf16.mxu0 0
        %1809 = vmatpush1.bf16.msra.mxu0 0
        %1810 = vmatprep.subr.bf16.mxu0 0
        %1811 = vmatpush1.bf16.msra.mxu0 0
        %1812 = vmatprep.subr.bf16.mxu0 0
        %1813 = vmatpush1.bf16.msra.mxu0 0
        %1814 = vmatprep.mubr.bf16.mxu0 0
        %1815 = vmatmul.mubr.bf16.gmra.mrb[0].mxu0 %v1780
        %v1816 = vpop.f32.mrb[0].mxu0
        %v1817 = vadd.f32 %v1767, %v1816
        %v1818 = vpop.f32.mrb[0].mxu0
        %v1819 = vadd.f32 %v1767, %v1818
        %v1820 = vpop.f32.mrb[0].mxu0
        %v1821 = vadd.f32 %v1772, %v1820
        %v1822 = vpop.f32.mrb[0].mxu0
        %v1823 = vadd.f32 %v1772, %v1822
        %1824 = vdwg.mxu0
        %v1825 = vmax.f32 %v1817, 0.0
        %v1826 = vmax.f32 %v1819, 0.0
        %v1827 = vmax.f32 %v1821, 0.0
        %v1828 = vmax.f32 %v1823, 0.0
        %v1829 = vld [vmem:[%s8] sm:$0xf]
        %v1830 = vld [vmem:[%s8 + $0x4] sm:$0xf]
        %v1831 = vpack.c.bf16 %v1827, %v1825
        %v1832 = vpack.c.bf16 %v1828, %v1826
        %v1833 = vld [vmem:[%s9] sm:$0xff]
        %v1834 = vld [vmem:[%s9 + $0x8] sm:$0xff]
        %1836 = vset.pattern.permute.xlu0 0
        %1837 = vperm.xlu0 %1836, %v1833
        %v1838 = vpop.permute.xlu0 %1837
        %1841 = vset.pattern.permute.xlu0 0
        %1842 = vperm.xlu0 %1841, %v1834
        %v1843 = vpop.permute.xlu0 %1842
        %v1847 = vunpack.c.l.b16 %v1829
        %v1848 = vunpack.c.l.b16 %v1830
        %v1849 = vpack.c.b16 %v1848, %v1847
        %v1851 = vsel %vm1174, %v1849, 0
        %1853 = vmatprep.subr.bf16.mxu0 %v1832
        %1854 = vmatpush1.bf16.msra.mxu0 %v1831
        %1855 = vmatprep.subr.bf16.mxu0 0
        %1856 = vmatpush1.bf16.msra.mxu0 0
        %1857 = vmatprep.subr.bf16.mxu0 0
        %1858 = vmatpush1.bf16.msra.mxu0 0
        %1859 = vmatprep.subr.bf16.mxu0 0
        %1860 = vmatpush1.bf16.msra.mxu0 0
        %1861 = vmatprep.subr.bf16.mxu0 0
        %1862 = vmatpush1.bf16.msra.mxu0 0
        %1863 = vmatprep.subr.bf16.mxu0 0
        %1864 = vmatpush1.bf16.msra.mxu0 0
        %1865 = vmatprep.subr.bf16.mxu0 0
        %1866 = vmatpush1.bf16.msra.mxu0 0
        %1867 = vmatprep.subr.bf16.mxu0 0
        %1868 = vmatpush1.bf16.msra.mxu0 0
        %1869 = vmatprep.subr.bf16.mxu0 0
        %1870 = vmatpush1.bf16.msra.mxu0 0
        %1871 = vmatprep.subr.bf16.mxu0 0
        %1872 = vmatpush1.bf16.msra.mxu0 0
        %1873 = vmatprep.subr.bf16.mxu0 0
        %1874 = vmatpush1.bf16.msra.mxu0 0
        %1875 = vmatprep.subr.bf16.mxu0 0
        %1876 = vmatpush1.bf16.msra.mxu0 0
        %1877 = vmatprep.subr.bf16.mxu0 0
        %1878 = vmatpush1.bf16.msra.mxu0 0
        %1879 = vmatprep.subr.bf16.mxu0 0
        %1880 = vmatpush1.bf16.msra.mxu0 0
        %1881 = vmatprep.subr.bf16.mxu0 0
        %1882 = vmatpush1.bf16.msra.mxu0 0
        %1883 = vmatprep.subr.bf16.mxu0 0
        %1884 = vmatpush1.bf16.msra.mxu0 0
        %1885 = vmatprep.mubr.bf16.mxu0 0
        %1886 = vmatmul.mubr.bf16.gmra.mrb[0].mxu0 %v1851
        %v1887 = vpop.f32.mrb[0].mxu0
        %v1888 = vadd.f32 %v1838, %v1887
        %v1889 = vpop.f32.mrb[0].mxu0
        %v1890 = vadd.f32 %v1838, %v1889
        %v1891 = vpop.f32.mrb[0].mxu0
        %v1892 = vadd.f32 %v1843, %v1891
        %v1893 = vpop.f32.mrb[0].mxu0
        %v1894 = vadd.f32 %v1843, %v1893
        %1895 = vdwg.mxu0
        %v1896 = vadd.f32 %v1888, %v1754
        %v1897 = vadd.f32 %v1890, %v1755
        %v1898 = vadd.f32 %v1892, %v1756
        %v1899 = vadd.f32 %v1894, %v1757
        %v1900 = vmax.f32 %v1896, 0.0
        %v1901 = vmax.f32 %v1897, 0.0
        %v1902 = vmax.f32 %v1898, 0.0
        %v1903 = vmax.f32 %v1899, 0.0
        %1904 = vst [vmem:[%s439] sm:$0xff] %v1900
        %1905 = vst [vmem:[%s439 + $0x8] sm:$0xff] %v1901
        %1906 = vst [vmem:[%s439 + $0x10] sm:$0xff] %v1902
        %1907 = vst [vmem:[%s439 + $0x18] sm:$0xff] %v1903
        %s1908 = sand.u32 %s276, 1
        %s1909 = scalar_lea.sflag [#allocation4], %s1908
        %s1910 = sand.u32 %s276, 1
        %s1911 = smul.addr %s1910, 32
        %s1912 = scalar_lea.vmem [#allocation7], %s1911
        // Predicated region
        $region69: #{tpu_custom_call.1} parent=59 // pred_check
          %p1913 = pneg %p286
        $region70: #{tpu_custom_call.1} parent=59 // pred_check_branch
          %1915 = sbr.rel (%p1913) target = $region72
        $region71: #{tpu_custom_call.1} parent=59 // pred_region
          %s1917 = ssub.s32 512, 512
          %1918 = vsyncadd %s1909, %s1917
          %s1919 = smul.addr %s35, 4
          %s1920 = smul.addr %s34, 8
          %s1921 = sadd.s32 %s1919, %s1920
          %s1922 = smul.addr %s1921, 128
          %s1923 = scalar_lea.hbm %s10, %s1922
          %s1924 = sshll.u32 %s1912, 4
          %s1925 = int_to_ptr.vmem [resolvable:$true] %s1924
          %1930 = dma.vmem_to_hbm [thread:$0]  %s1925, 512, %s1923, %s1909, 256, 256, 16
        $region72: #{tpu_custom_call.1} parent=59 // pred_fallthru
          _
      $region60: #{tpu_custom_call.1} parent=5 // pred_fallthru
        _
      %p1931 = scmp.le.s32.totalorder 2, %s25
      // Predicated region
      $region73: #{tpu_custom_call.1} parent=5 // pred_check
        %p1932 = pneg %p1931
      $region74: #{tpu_custom_call.1} parent=5 // pred_check_branch
        %1934 = sbr.rel (%p1932) target = $region76
      $region75: #{tpu_custom_call.1} parent=5 // pred_region
        %s1935 = ssub.s32 %s25, 2
        // Predicated region
        $region77: #{tpu_custom_call.1} parent=75 // pred_check
          %p1936 = pneg %p292
        $region78: #{tpu_custom_call.1} parent=75 // pred_check_branch
          %1938 = sbr.rel (%p1936) target = $region80
        $region79: #{tpu_custom_call.1} parent=75 // pred_region
          %s1939 = sand.u32 %s277, 1
          %s1940 = scalar_lea.sflag [#allocation4], %s1939
          %s1941 = sand.u32 %s277, 1
          %s1942 = smul.addr %s1941, 32
          %s1943 = scalar_lea.vmem [#allocation7], %s1942
          %1944 = dma.done %s1940, 512
        $region80: #{tpu_custom_call.1} parent=75 // pred_fallthru
          _
      $region76: #{tpu_custom_call.1} parent=5 // pred_fallthru
        _
    $region6: #{tpu_custom_call.1} parent=1 // loop_footer
      %s29 = sadd.s32 1, %s25
    $region7: #{tpu_custom_call.1} parent=1 // loop_footer_branch
      %24 = sbr.rel target = $region3
    $region8: #{tpu_custom_call.1} parent=1 // loop_exit
      _
    %1945 = vsyncpa [#allocation3], 1
    %s1946 = scalar_lea.sflag [#allocation3], 1
    %1947 = vsyncpa %s1946, 1
    %1948 = vsyncpa [#allocation6], 1
    %s1949 = scalar_lea.sflag [#allocation6], 1
    %1950 = vsyncpa %s1949, 1
    %1951 = vsyncpa [#allocation4], 1
    %s1952 = scalar_lea.sflag [#allocation4], 1
    %1953 = vsyncpa %s1952, 1

</llo_original>
